<compile_context>
chip_gen: v5e
topology: v5e:2x2
jax: 0.10.0
libtpu: 0.0.40
codegen_flags: <defaults>
</compile_context>

<pallas_src>
import functools
import math

import jax
import jax.numpy as jnp
from jax import lax
from jax.experimental import pallas as pl
from jax.experimental.pallas import tpu as pltpu


# ---------------------------------------------------------------------------
# Kernel bodies
# ---------------------------------------------------------------------------

def _attention_core(Qf, Kf, Vf, e_ref, f_ref, wo_ref, bo,
                    *, n_head, d_k, approx_recip):
    """Linformer attention core shared by both kernels.

    Qf/Kf/Vf: (S, D) float32 activations after the input projections (the
    1/sqrt(d_k) scale is already folded into Wq/bq wrapper-side).
    Returns the (S, D) float32 pre-cast output (W_O applied, bias added).
    """
    Qb = Qf.astype(jnp.bfloat16)
    Kb = Kf.astype(jnp.bfloat16)
    Vb = Vf.astype(jnp.bfloat16)

    E = e_ref[...]            # (S, k_dim) bf16
    F = f_ref[...]            # (S, k_dim) bf16

    # Linformer low-rank projections, hoisted out of the head loop:
    #   Kproj = K^T @ E -> (D, k_dim),   Vproj = F^T @ V -> (k_dim, D).
    # Both contract dim 0 of the LHS, which lowers to a trans_a MXU matmul
    # (no explicit vxpose of the (S, D) tile in the Mosaic dump at these shapes).
    Kproj = lax.dot_general(Kb, E, (((0,), (0,)), ((), ())),
                            preferred_element_type=jnp.float32).astype(jnp.bfloat16)
    Vproj = lax.dot_general(F, Vb, (((0,), (0,)), ((), ())),
                            preferred_element_type=jnp.float32).astype(jnp.bfloat16)

    out = None
    for h in range(n_head):                       # unrolled; n_head is static
        lo = h * d_k
        hi = lo + d_k
        # TODO(synk): when d_k is not a multiple of 128 these lane slices need
        # masked vreg selects; a head-major (n_head, S, d_k) Q layout would make
        # them sublane-aligned at the cost of narrow-N projection matmuls.
        scores = jnp.dot(Qb[:, lo:hi], Kproj[lo:hi, :],
                         preferred_element_type=jnp.float32)          # (S, k_dim)
        m = jnp.max(scores, axis=-1, keepdims=True)
        p = jnp.exp(scores - m)
        denom = jnp.sum(p, axis=-1, keepdims=True)
        if approx_recip:
            attn = p * pl.reciprocal(denom, approx=True)              # EUP slot
        else:
            attn = p / denom
        # TODO(synk): nn.Dropout on attn is identity at inference; not applied.
        out_h = jnp.dot(attn.astype(jnp.bfloat16), Vproj[:, lo:hi],
                        preferred_element_type=jnp.float32)           # (S, d_k)
        # Output projection accumulated per head against Wo reshaped to
        # (n_head, d_k, D) wrapper-side.  Removes the previous (S, D) concat
        # scratch and its masked sub-128-lane stores; every MXU result here is
        # lane-dense (N = D) and accumulated in f32 registers.
        contrib = jnp.dot(out_h.astype(jnp.bfloat16), wo_ref[h],
                          preferred_element_type=jnp.float32)         # (S, D)
        out = contrib if out is None else out + contrib
    return out + bo


def _selfattn_kernel(x_ref, wqkv_ref, wo_ref, b_ref, e_ref, f_ref, o_ref,
                     *, n_head, d_k, approx_recip):
    """Fused fast path (q is k is v): one activation DMA, one (S,D)@(D,3D) matmul."""
    D = x_ref.shape[2]
    x = x_ref[0].astype(jnp.bfloat16)                                  # cast in VMEM
    qkv = jnp.dot(x, wqkv_ref[...], preferred_element_type=jnp.float32)  # (S, 3D)
    Qf = qkv[:, 0:D] + b_ref[0:1, :]
    Kf = qkv[:, D:2 * D] + b_ref[1:2, :]
    Vf = qkv[:, 2 * D:3 * D] + b_ref[2:3, :]
    out = _attention_core(Qf, Kf, Vf, e_ref, f_ref, wo_ref, b_ref[3:4, :],
                          n_head=n_head, d_k=d_k, approx_recip=approx_recip)
    o_ref[0] = out.astype(o_ref.dtype)


def _crossattn_kernel(q_ref, k_ref, v_ref, wqkv_ref, wo_ref, b_ref, e_ref, f_ref,
                      o_ref, *, n_head, d_k, approx_recip):
    """General path: distinct q / k / v streams, packed (3, D, D) weights."""
    qb = q_ref[0].astype(jnp.bfloat16)
    kb = k_ref[0].astype(jnp.bfloat16)
    vb = v_ref[0].astype(jnp.bfloat16)
    Qf = jnp.dot(qb, wqkv_ref[0], preferred_element_type=jnp.float32) + b_ref[0:1, :]
    Kf = jnp.dot(kb, wqkv_ref[1], preferred_element_type=jnp.float32) + b_ref[1:2, :]
    Vf = jnp.dot(vb, wqkv_ref[2], preferred_element_type=jnp.float32) + b_ref[2:3, :]
    out = _attention_core(Qf, Kf, Vf, e_ref, f_ref, wo_ref, b_ref[3:4, :],
                          n_head=n_head, d_k=d_k, approx_recip=approx_recip)
    o_ref[0] = out.astype(o_ref.dtype)


# ---------------------------------------------------------------------------
# Wrapper
# ---------------------------------------------------------------------------

def _vmem_limit_bytes(S, D, k_dim, fused, act_bytes, out_bytes):
    """Explicit scoped-VMEM budget from actual residency (weights single-buffered)."""
    weights = 3 * D * D * 2 + D * D * 2 + 4 * D * 4 + 2 * S * k_dim * 2
    n_act = 1 if fused else 3
    io = 2 * n_act * S * D * act_bytes + 2 * S * D * out_bytes          # double-buffered
    live = (3 * S * D * 4        # Qf/Kf/Vf f32
            + 3 * S * D * 2      # bf16 copies
            + 2 * D * k_dim * 4  # Kproj / Vproj
            + 4 * S * k_dim * 4  # scores / p / attn temporaries
            + S * D * 4)         # output accumulator
    total = weights + io + live
    return int(min(max(total * 3 // 2 + (2 << 20), 16 << 20), 64 << 20))


def linear_self_attention(q, k, v, kparams, n_head, *,
                          out_dtype=jnp.bfloat16, approx_recip=True):
    """q, k, v: (B, S, D) arrays (any float dtype; cast to bf16 inside the kernel)."""
    B, S, D = q.shape
    assert D % n_head == 0, "d_model must be divisible by n_head"
    assert q.shape == k.shape == v.shape
    d_k = D // n_head
    k_dim = kparams["E"].shape[1]
    fused = (q is k) and (q is v)

    act_bytes = q.dtype.itemsize
    out_bytes = jnp.dtype(out_dtype).itemsize

    flops = B * (8 * S * D * D + 8 * S * D * k_dim)
    transcendentals = B * n_head * S * (k_dim + 1)
    w_bytes = (3 * D * D + D * D) * 2 + 4 * D * 4 + 2 * S * k_dim * 2
    bytes_accessed = ((1 if fused else 3) * B * S * D * act_bytes
                      + w_bytes + B * S * D * out_bytes)

    act_spec = pl.BlockSpec((1, S, D), lambda b: (b, 0, 0))
    kernel_kwargs = dict(n_head=n_head, d_k=d_k, approx_recip=approx_recip)

    def _run(single_buffer_weights):
        def const_spec(shape):
            zeros = (0,) * len(shape)
            if single_buffer_weights:
                # Grid-invariant operand: single-buffer it (index_map is constant).
                return pl.BlockSpec(shape, lambda b, _z=zeros: _z,
                                    pipeline_mode=pl.Buffered(1))
            return pl.BlockSpec(shape, lambda b, _z=zeros: _z)

        common = dict(
            out_shape=jax.ShapeDtypeStruct((B, S, D), out_dtype),
            grid=(B,),
            out_specs=act_spec,
            compiler_params=pltpu.CompilerParams(
                dimension_semantics=("parallel",),
                vmem_limit_bytes=_vmem_limit_bytes(S, D, k_dim, fused,
                                                   act_bytes, out_bytes)),
            cost_estimate=pl.CostEstimate(flops=flops,
                                          transcendentals=transcendentals,
                                          bytes_accessed=bytes_accessed),
        )

        if fused:
            kernel = functools.partial(_selfattn_kernel, **kernel_kwargs)
            return pl.pallas_call(
                kernel,
                in_specs=[act_spec,
                          const_spec((D, 3 * D)),
                          const_spec((n_head, d_k, D)),
                          const_spec((4, D)),
                          const_spec((S, k_dim)),
                          const_spec((S, k_dim))],
                **common,
            )(q, kparams["Wqkv_fused"], kparams["Wo_heads"], kparams["bias"],
              kparams["E"], kparams["F"])

        kernel = functools.partial(_crossattn_kernel, **kernel_kwargs)
        return pl.pallas_call(
            kernel,
            in_specs=[act_spec, act_spec, act_spec,
                      const_spec((3, D, D)),
                      const_spec((n_head, d_k, D)),
                      const_spec((4, D)),
                      const_spec((S, k_dim)),
                      const_spec((S, k_dim))],
            **common,
        )(q, k, v, kparams["Wqkv_stack"], kparams["Wo_heads"], kparams["bias"],
          kparams["E"], kparams["F"])

    try:
        return _run(single_buffer_weights=True)
    except Exception:
        # pl.Buffered(1) on the main grid pipeline may be unsupported on some
        # JAX versions; retry with default double-buffering (perf-only change).
        return _run(single_buffer_weights=False)


# ---------------------------------------------------------------------------
# Parameter packing / reference
# ---------------------------------------------------------------------------

def pack_params(params, n_head):
    """Fold 1/sqrt(d_k) into Wq/bq, pack weights & biases, cast to bf16."""
    D = params["Wq"].shape[0]
    d_k = D // n_head
    scale = 1.0 / math.sqrt(d_k)
    wq = params["Wq"] * scale
    return {
        # Stacked form for the general (cross-attention) path.
        "Wqkv_stack": jnp.stack([wq, params["Wk"], params["Wv"]],
                                axis=0).astype(jnp.bfloat16),          # (3, D, D)
        # Fused form for the self-attention fast path.
        "Wqkv_fused": jnp.concatenate([wq, params["Wk"], params["Wv"]],
                                      axis=1).astype(jnp.bfloat16),    # (D, 3D)
        # Output weights reshaped head-major for per-head accumulation.
        "Wo_heads": params["Wo"].reshape(n_head, d_k, D).astype(jnp.bfloat16),
        "bias": jnp.concatenate([params["bq"] * scale, params["bk"],
                                 params["bv"], params["bo"]],
                                axis=0).astype(jnp.float32),           # (4, D)
        "E": params["E"].astype(jnp.bfloat16),                         # (S, k_dim)
        "F": params["F"].astype(jnp.bfloat16),                         # (S, k_dim)
    }


def reference(q, k, v, params, n_head):
    """Pure-JAX f32 mirror of the PyTorch forward."""
    B, S, D = q.shape
    d_k = D // n_head
    Q = q @ params["Wq"] + params["bq"]
    K = k @ params["Wk"] + params["bk"]
    V = v @ params["Wv"] + params["bv"]
    Q = Q.reshape(B, S, n_head, d_k).transpose(0, 2, 1, 3)
    K = K.reshape(B, S, n_head, d_k).transpose(0, 2, 1, 3)
    V = V.reshape(B, S, n_head, d_k).transpose(0, 2, 1, 3)
    Kp = jnp.einsum("bhsd,sk->bhdk", K, params["E"])
    Vp = jnp.einsum("bhsd,sk->bhkd", V, params["F"])
    scores = jnp.einsum("bhsd,bhdk->bhsk", Q / math.sqrt(d_k), Kp)
    attn = jax.nn.softmax(scores, axis=-1)
    out = jnp.einsum("bhsk,bhkd->bhsd", attn, Vp)
    out = out.transpose(0, 2, 1, 3).reshape(B, S, D)
    return out @ params["Wo"] + params["bo"]


def init_params(key, d_model, seq_len, k_dim):
    keys = jax.random.split(key, 6)
    bound = math.sqrt(6.0 / (d_model + d_model))   # xavier_uniform for square Linear

    def xavier(kk):
        return jax.random.uniform(kk, (d_model, d_model), jnp.float32, -bound, bound)

    return {
        "Wq": xavier(keys[0]), "bq": jnp.zeros((1, d_model), jnp.float32),
        "Wk": xavier(keys[1]), "bk": jnp.zeros((1, d_model), jnp.float32),
        "Wv": xavier(keys[2]), "bv": jnp.zeros((1, d_model), jnp.float32),
        "Wo": xavier(keys[3]), "bo": jnp.zeros((1, d_model), jnp.float32),
        "E": jax.random.normal(keys[4], (seq_len, k_dim), jnp.float32) / math.sqrt(k_dim),
        "F": jax.random.normal(keys[5], (seq_len, k_dim), jnp.float32) / math.sqrt(k_dim),
    }


if __name__ == "__main__":
    B, S, D, H = 2, 16, 32, 4          # batch, seq_len, d_model, n_head
    d_k = D // H
    k_dim = d_k                        # module default: k_dim = d_k

    root = jax.random.PRNGKey(0)
    pkey, qk_, kk_, vk_ = jax.random.split(root, 4)

    params = init_params(pkey, D, S, k_dim)
    kparams = pack_params(params, H)

    q = jax.random.normal(qk_, (B, S, D), jnp.float32)
    k = jax.random.normal(kk_, (B, S, D), jnp.float32)
    v = jax.random.normal(vk_, (B, S, D), jnp.float32)

    # Tolerance reflects an end-to-end bf16 datapath (bf16 weights/activations/
    # intermediates/output with f32 accumulation) against the f32 reference.
    RTOL = ATOL = 1e-1

    # General path (distinct q / k / v).
    out = jax.block_until_ready(linear_self_attention(q, k, v, kparams, H))
    ref = reference(q, k, v, params, H)
    assert out.shape == (B, S, D)
    err = jnp.max(jnp.abs(out.astype(jnp.float32) - ref))
    assert jnp.allclose(out.astype(jnp.float32), ref, rtol=RTOL, atol=ATOL), \
        f"cross-attn max abs err = {err}"

    # Fused self-attention fast path (q is k is v).
    out_self = jax.block_until_ready(linear_self_attention(q, q, q, kparams, H))
    ref_self = reference(q, q, q, params, H)
    err_self = jnp.max(jnp.abs(out_self.astype(jnp.float32) - ref_self))
    assert jnp.allclose(out_self.astype(jnp.float32), ref_self, rtol=RTOL, atol=ATOL), \
        f"self-attn max abs err = {err_self}"

    print("KERNEL_OK")
</pallas_src>

<mosaic_0001>
module attributes {stable_mosaic.version = 11 : i64} {
  func.func @_crossattn_kernel(%arg0: i32, %arg1: memref<1x16x32xf32, #tpu.memory_space<vmem>>, %arg2: memref<1x16x32xf32, #tpu.memory_space<vmem>>, %arg3: memref<1x16x32xf32, #tpu.memory_space<vmem>>, %arg4: memref<3x32x32xbf16, #tpu.memory_space<vmem>>, %arg5: memref<4x8x32xbf16, #tpu.memory_space<vmem>>, %arg6: memref<4x32xf32, #tpu.memory_space<vmem>>, %arg7: memref<16x8xbf16, #tpu.memory_space<vmem>>, %arg8: memref<16x8xbf16, #tpu.memory_space<vmem>>, %arg9: memref<1x16x32xbf16, #tpu.memory_space<vmem>>) attributes {dimension_semantics = [#tpu.dimension_semantics<parallel>], iteration_bounds = array<i64: 2>, scalar_prefetch = 0 : i64, scratch_operands = 0 : i64, tpu.core_type = #tpu.core_type<tc>, window_params = [{transform_indices = @transform_0, window_bounds = array<i64: 1, 16, 32>}, {transform_indices = @transform_1, window_bounds = array<i64: 1, 16, 32>}, {transform_indices = @transform_2, window_bounds = array<i64: 1, 16, 32>}, {pipeline_mode = #tpu.pipeline_mode<synchronous>, transform_indices = @transform_3, window_bounds = array<i64: 3, 32, 32>}, {pipeline_mode = #tpu.pipeline_mode<synchronous>, transform_indices = @transform_4, window_bounds = array<i64: 4, 8, 32>}, {pipeline_mode = #tpu.pipeline_mode<synchronous>, transform_indices = @transform_5, window_bounds = array<i64: 4, 32>}, {pipeline_mode = #tpu.pipeline_mode<synchronous>, transform_indices = @transform_6, window_bounds = array<i64: 16, 8>}, {pipeline_mode = #tpu.pipeline_mode<synchronous>, transform_indices = @transform_7, window_bounds = array<i64: 16, 8>}, {transform_indices = @transform_8, window_bounds = array<i64: 1, 16, 32>}]} {
    %c0 = arith.constant 0 : index
    %c0_0 = arith.constant 0 : index
    %c0_1 = arith.constant 0 : index
    %0 = vector.load %arg1[%c0, %c0_0, %c0_1] : memref<1x16x32xf32, #tpu.memory_space<vmem>>, vector<1x16x32xf32>
    %1 = vector.shape_cast %0 : vector<1x16x32xf32> to vector<16x32xf32>
    %2 = arith.truncf %1 : vector<16x32xf32> to vector<16x32xbf16>
    %c0_2 = arith.constant 0 : index
    %c0_3 = arith.constant 0 : index
    %c0_4 = arith.constant 0 : index
    %3 = vector.load %arg2[%c0_2, %c0_3, %c0_4] : memref<1x16x32xf32, #tpu.memory_space<vmem>>, vector<1x16x32xf32>
    %4 = vector.shape_cast %3 : vector<1x16x32xf32> to vector<16x32xf32>
    %5 = arith.truncf %4 : vector<16x32xf32> to vector<16x32xbf16>
    %c0_5 = arith.constant 0 : index
    %c0_6 = arith.constant 0 : index
    %c0_7 = arith.constant 0 : index
    %6 = vector.load %arg3[%c0_5, %c0_6, %c0_7] : memref<1x16x32xf32, #tpu.memory_space<vmem>>, vector<1x16x32xf32>
    %7 = vector.shape_cast %6 : vector<1x16x32xf32> to vector<16x32xf32>
    %8 = arith.truncf %7 : vector<16x32xf32> to vector<16x32xbf16>
    %c0_8 = arith.constant 0 : index
    %c0_9 = arith.constant 0 : index
    %c0_10 = arith.constant 0 : index
    %9 = vector.load %arg4[%c0_8, %c0_9, %c0_10] : memref<3x32x32xbf16, #tpu.memory_space<vmem>>, vector<1x32x32xbf16>
    %10 = vector.shape_cast %9 : vector<1x32x32xbf16> to vector<32x32xbf16>
    %cst = arith.constant dense<0.000000e+00> : vector<16x32xf32>
    %11 = tpu.matmul %2, %10, %cst {dimension_numbers = #tpu.dot_dimension_numbers<[1], [0], [0], [1], [0, 0, 1, 1], [], []>} : vector<16x32xbf16>, vector<32x32xbf16>, vector<16x32xf32> -> vector<16x32xf32>
    %c0_11 = arith.constant 0 : index
    %c0_12 = arith.constant 0 : index
    %12 = vector.load %arg6[%c0_11, %c0_12] : memref<4x32xf32, #tpu.memory_space<vmem>>, vector<1x32xf32>
    %13 = vector.broadcast %12 : vector<1x32xf32> to vector<16x32xf32>
    %14 = arith.addf %11, %13 : vector<16x32xf32>
    %c1 = arith.constant 1 : index
    %c0_13 = arith.constant 0 : index
    %c0_14 = arith.constant 0 : index
    %15 = vector.load %arg4[%c1, %c0_13, %c0_14] : memref<3x32x32xbf16, #tpu.memory_space<vmem>>, vector<1x32x32xbf16>
    %16 = vector.shape_cast %15 : vector<1x32x32xbf16> to vector<32x32xbf16>
    %cst_15 = arith.constant dense<0.000000e+00> : vector<16x32xf32>
    %17 = tpu.matmul %5, %16, %cst_15 {dimension_numbers = #tpu.dot_dimension_numbers<[1], [0], [0], [1], [0, 0, 1, 1], [], []>} : vector<16x32xbf16>, vector<32x32xbf16>, vector<16x32xf32> -> vector<16x32xf32>
    %c1_16 = arith.constant 1 : index
    %c0_17 = arith.constant 0 : index
    %18 = vector.load %arg6[%c1_16, %c0_17] : memref<4x32xf32, #tpu.memory_space<vmem>>, vector<1x32xf32>
    %19 = vector.broadcast %18 : vector<1x32xf32> to vector<16x32xf32>
    %20 = arith.addf %17, %19 : vector<16x32xf32>
    %c2 = arith.constant 2 : index
    %c0_18 = arith.constant 0 : index
    %c0_19 = arith.constant 0 : index
    %21 = vector.load %arg4[%c2, %c0_18, %c0_19] : memref<3x32x32xbf16, #tpu.memory_space<vmem>>, vector<1x32x32xbf16>
    %22 = vector.shape_cast %21 : vector<1x32x32xbf16> to vector<32x32xbf16>
    %cst_20 = arith.constant dense<0.000000e+00> : vector<16x32xf32>
    %23 = tpu.matmul %8, %22, %cst_20 {dimension_numbers = #tpu.dot_dimension_numbers<[1], [0], [0], [1], [0, 0, 1, 1], [], []>} : vector<16x32xbf16>, vector<32x32xbf16>, vector<16x32xf32> -> vector<16x32xf32>
    %c2_21 = arith.constant 2 : index
    %c0_22 = arith.constant 0 : index
    %24 = vector.load %arg6[%c2_21, %c0_22] : memref<4x32xf32, #tpu.memory_space<vmem>>, vector<1x32xf32>
    %25 = vector.broadcast %24 : vector<1x32xf32> to vector<16x32xf32>
    %26 = arith.addf %23, %25 : vector<16x32xf32>
    %c3 = arith.constant 3 : index
    %c0_23 = arith.constant 0 : index
    %27 = vector.load %arg6[%c3, %c0_23] : memref<4x32xf32, #tpu.memory_space<vmem>>, vector<1x32xf32>
    %28 = arith.truncf %14 : vector<16x32xf32> to vector<16x32xbf16>
    %29 = arith.truncf %20 : vector<16x32xf32> to vector<16x32xbf16>
    %30 = arith.truncf %26 : vector<16x32xf32> to vector<16x32xbf16>
    %c0_24 = arith.constant 0 : index
    %c0_25 = arith.constant 0 : index
    %31 = vector.load %arg7[%c0_24, %c0_25] : memref<16x8xbf16, #tpu.memory_space<vmem>>, vector<16x8xbf16>
    %c0_26 = arith.constant 0 : index
    %c0_27 = arith.constant 0 : index
    %32 = vector.load %arg8[%c0_26, %c0_27] : memref<16x8xbf16, #tpu.memory_space<vmem>>, vector<16x8xbf16>
    %cst_28 = arith.constant dense<0.000000e+00> : vector<32x8xf32>
    %33 = tpu.matmul %29, %31, %cst_28 {dimension_numbers = #tpu.dot_dimension_numbers<[0], [0], [1], [1], [0, 1, 1, 1], [], []>} : vector<16x32xbf16>, vector<16x8xbf16>, vector<32x8xf32> -> vector<32x8xf32>
    %34 = arith.truncf %33 : vector<32x8xf32> to vector<32x8xbf16>
    %cst_29 = arith.constant dense<0.000000e+00> : vector<8x32xf32>
    %35 = tpu.matmul %32, %30, %cst_29 {dimension_numbers = #tpu.dot_dimension_numbers<[0], [0], [1], [1], [0, 1, 1, 1], [], []>} : vector<16x8xbf16>, vector<16x32xbf16>, vector<8x32xf32> -> vector<8x32xf32>
    %36 = arith.truncf %35 : vector<8x32xf32> to vector<8x32xbf16>
    %37 = vector.extract_strided_slice %28 {offsets = [0, 0], sizes = [16, 8], strides = [1, 1]} : vector<16x32xbf16> to vector<16x8xbf16>
    %38 = vector.extract_strided_slice %34 {offsets = [0, 0], sizes = [8, 8], strides = [1, 1]} : vector<32x8xbf16> to vector<8x8xbf16>
    %cst_30 = arith.constant dense<0.000000e+00> : vector<16x8xf32>
    %39 = tpu.matmul %37, %38, %cst_30 {dimension_numbers = #tpu.dot_dimension_numbers<[1], [0], [0], [1], [0, 0, 1, 1], [], []>} : vector<16x8xbf16>, vector<8x8xbf16>, vector<16x8xf32> -> vector<16x8xf32>
    %cst_31 = arith.constant dense<0xFF800000> : vector<16xf32>
    %40 = vector.multi_reduction <maximumf>, %39, %cst_31 [1] : vector<16x8xf32> to vector<16xf32>
    %41 = vector.shape_cast %40 : vector<16xf32> to vector<16x1xf32>
    %42 = vector.broadcast %41 : vector<16x1xf32> to vector<16x8xf32>
    %43 = arith.subf %39, %42 : vector<16x8xf32>
    %44 = math.exp %43 : vector<16x8xf32>
    %cst_32 = arith.constant dense<0.000000e+00> : vector<16xf32>
    %45 = vector.multi_reduction <add>, %44, %cst_32 [1] : vector<16x8xf32> to vector<16xf32>
    %46 = vector.shape_cast %45 : vector<16xf32> to vector<16x1xf32>
    %47 = tpu.reciprocal %46 {approx = true} : vector<16x1xf32> -> vector<16x1xf32>
    %48 = vector.broadcast %47 : vector<16x1xf32> to vector<16x8xf32>
    %49 = arith.mulf %44, %48 : vector<16x8xf32>
    %50 = arith.truncf %49 : vector<16x8xf32> to vector<16x8xbf16>
    %51 = vector.extract_strided_slice %36 {offsets = [0, 0], sizes = [8, 8], strides = [1, 1]} : vector<8x32xbf16> to vector<8x8xbf16>
    %cst_33 = arith.constant dense<0.000000e+00> : vector<16x8xf32>
    %52 = tpu.matmul %50, %51, %cst_33 {dimension_numbers = #tpu.dot_dimension_numbers<[1], [0], [0], [1], [0, 0, 1, 1], [], []>} : vector<16x8xbf16>, vector<8x8xbf16>, vector<16x8xf32> -> vector<16x8xf32>
    %53 = arith.truncf %52 : vector<16x8xf32> to vector<16x8xbf16>
    %c0_34 = arith.constant 0 : index
    %c0_35 = arith.constant 0 : index
    %c0_36 = arith.constant 0 : index
    %54 = vector.load %arg5[%c0_34, %c0_35, %c0_36] : memref<4x8x32xbf16, #tpu.memory_space<vmem>>, vector<1x8x32xbf16>
    %55 = vector.shape_cast %54 : vector<1x8x32xbf16> to vector<8x32xbf16>
    %cst_37 = arith.constant dense<0.000000e+00> : vector<16x32xf32>
    %56 = tpu.matmul %53, %55, %cst_37 {dimension_numbers = #tpu.dot_dimension_numbers<[1], [0], [0], [1], [0, 0, 1, 1], [], []>} : vector<16x8xbf16>, vector<8x32xbf16>, vector<16x32xf32> -> vector<16x32xf32>
    %57 = vector.extract_strided_slice %28 {offsets = [0, 8], sizes = [16, 8], strides = [1, 1]} : vector<16x32xbf16> to vector<16x8xbf16>
    %58 = vector.extract_strided_slice %34 {offsets = [8, 0], sizes = [8, 8], strides = [1, 1]} : vector<32x8xbf16> to vector<8x8xbf16>
    %cst_38 = arith.constant dense<0.000000e+00> : vector<16x8xf32>
    %59 = tpu.matmul %57, %58, %cst_38 {dimension_numbers = #tpu.dot_dimension_numbers<[1], [0], [0], [1], [0, 0, 1, 1], [], []>} : vector<16x8xbf16>, vector<8x8xbf16>, vector<16x8xf32> -> vector<16x8xf32>
    %cst_39 = arith.constant dense<0xFF800000> : vector<16xf32>
    %60 = vector.multi_reduction <maximumf>, %59, %cst_39 [1] : vector<16x8xf32> to vector<16xf32>
    %61 = vector.shape_cast %60 : vector<16xf32> to vector<16x1xf32>
    %62 = vector.broadcast %61 : vector<16x1xf32> to vector<16x8xf32>
    %63 = arith.subf %59, %62 : vector<16x8xf32>
    %64 = math.exp %63 : vector<16x8xf32>
    %cst_40 = arith.constant dense<0.000000e+00> : vector<16xf32>
    %65 = vector.multi_reduction <add>, %64, %cst_40 [1] : vector<16x8xf32> to vector<16xf32>
    %66 = vector.shape_cast %65 : vector<16xf32> to vector<16x1xf32>
    %67 = tpu.reciprocal %66 {approx = true} : vector<16x1xf32> -> vector<16x1xf32>
    %68 = vector.broadcast %67 : vector<16x1xf32> to vector<16x8xf32>
    %69 = arith.mulf %64, %68 : vector<16x8xf32>
    %70 = arith.truncf %69 : vector<16x8xf32> to vector<16x8xbf16>
    %71 = vector.extract_strided_slice %36 {offsets = [0, 8], sizes = [8, 8], strides = [1, 1]} : vector<8x32xbf16> to vector<8x8xbf16>
    %cst_41 = arith.constant dense<0.000000e+00> : vector<16x8xf32>
    %72 = tpu.matmul %70, %71, %cst_41 {dimension_numbers = #tpu.dot_dimension_numbers<[1], [0], [0], [1], [0, 0, 1, 1], [], []>} : vector<16x8xbf16>, vector<8x8xbf16>, vector<16x8xf32> -> vector<16x8xf32>
    %73 = arith.truncf %72 : vector<16x8xf32> to vector<16x8xbf16>
    %c1_42 = arith.constant 1 : index
    %c0_43 = arith.constant 0 : index
    %c0_44 = arith.constant 0 : index
    %74 = vector.load %arg5[%c1_42, %c0_43, %c0_44] : memref<4x8x32xbf16, #tpu.memory_space<vmem>>, vector<1x8x32xbf16>
    %75 = vector.shape_cast %74 : vector<1x8x32xbf16> to vector<8x32xbf16>
    %cst_45 = arith.constant dense<0.000000e+00> : vector<16x32xf32>
    %76 = tpu.matmul %73, %75, %cst_45 {dimension_numbers = #tpu.dot_dimension_numbers<[1], [0], [0], [1], [0, 0, 1, 1], [], []>} : vector<16x8xbf16>, vector<8x32xbf16>, vector<16x32xf32> -> vector<16x32xf32>
    %77 = arith.addf %56, %76 : vector<16x32xf32>
    %78 = vector.extract_strided_slice %28 {offsets = [0, 16], sizes = [16, 8], strides = [1, 1]} : vector<16x32xbf16> to vector<16x8xbf16>
    %79 = vector.extract_strided_slice %34 {offsets = [16, 0], sizes = [8, 8], strides = [1, 1]} : vector<32x8xbf16> to vector<8x8xbf16>
    %cst_46 = arith.constant dense<0.000000e+00> : vector<16x8xf32>
    %80 = tpu.matmul %78, %79, %cst_46 {dimension_numbers = #tpu.dot_dimension_numbers<[1], [0], [0], [1], [0, 0, 1, 1], [], []>} : vector<16x8xbf16>, vector<8x8xbf16>, vector<16x8xf32> -> vector<16x8xf32>
    %cst_47 = arith.constant dense<0xFF800000> : vector<16xf32>
    %81 = vector.multi_reduction <maximumf>, %80, %cst_47 [1] : vector<16x8xf32> to vector<16xf32>
    %82 = vector.shape_cast %81 : vector<16xf32> to vector<16x1xf32>
    %83 = vector.broadcast %82 : vector<16x1xf32> to vector<16x8xf32>
    %84 = arith.subf %80, %83 : vector<16x8xf32>
    %85 = math.exp %84 : vector<16x8xf32>
    %cst_48 = arith.constant dense<0.000000e+00> : vector<16xf32>
    %86 = vector.multi_reduction <add>, %85, %cst_48 [1] : vector<16x8xf32> to vector<16xf32>
    %87 = vector.shape_cast %86 : vector<16xf32> to vector<16x1xf32>
    %88 = tpu.reciprocal %87 {approx = true} : vector<16x1xf32> -> vector<16x1xf32>
    %89 = vector.broadcast %88 : vector<16x1xf32> to vector<16x8xf32>
    %90 = arith.mulf %85, %89 : vector<16x8xf32>
    %91 = arith.truncf %90 : vector<16x8xf32> to vector<16x8xbf16>
    %92 = vector.extract_strided_slice %36 {offsets = [0, 16], sizes = [8, 8], strides = [1, 1]} : vector<8x32xbf16> to vector<8x8xbf16>
    %cst_49 = arith.constant dense<0.000000e+00> : vector<16x8xf32>
    %93 = tpu.matmul %91, %92, %cst_49 {dimension_numbers = #tpu.dot_dimension_numbers<[1], [0], [0], [1], [0, 0, 1, 1], [], []>} : vector<16x8xbf16>, vector<8x8xbf16>, vector<16x8xf32> -> vector<16x8xf32>
    %94 = arith.truncf %93 : vector<16x8xf32> to vector<16x8xbf16>
    %c2_50 = arith.constant 2 : index
    %c0_51 = arith.constant 0 : index
    %c0_52 = arith.constant 0 : index
    %95 = vector.load %arg5[%c2_50, %c0_51, %c0_52] : memref<4x8x32xbf16, #tpu.memory_space<vmem>>, vector<1x8x32xbf16>
    %96 = vector.shape_cast %95 : vector<1x8x32xbf16> to vector<8x32xbf16>
    %cst_53 = arith.constant dense<0.000000e+00> : vector<16x32xf32>
    %97 = tpu.matmul %94, %96, %cst_53 {dimension_numbers = #tpu.dot_dimension_numbers<[1], [0], [0], [1], [0, 0, 1, 1], [], []>} : vector<16x8xbf16>, vector<8x32xbf16>, vector<16x32xf32> -> vector<16x32xf32>
    %98 = arith.addf %77, %97 : vector<16x32xf32>
    %99 = vector.extract_strided_slice %28 {offsets = [0, 24], sizes = [16, 8], strides = [1, 1]} : vector<16x32xbf16> to vector<16x8xbf16>
    %100 = vector.extract_strided_slice %34 {offsets = [24, 0], sizes = [8, 8], strides = [1, 1]} : vector<32x8xbf16> to vector<8x8xbf16>
    %cst_54 = arith.constant dense<0.000000e+00> : vector<16x8xf32>
    %101 = tpu.matmul %99, %100, %cst_54 {dimension_numbers = #tpu.dot_dimension_numbers<[1], [0], [0], [1], [0, 0, 1, 1], [], []>} : vector<16x8xbf16>, vector<8x8xbf16>, vector<16x8xf32> -> vector<16x8xf32>
    %cst_55 = arith.constant dense<0xFF800000> : vector<16xf32>
    %102 = vector.multi_reduction <maximumf>, %101, %cst_55 [1] : vector<16x8xf32> to vector<16xf32>
    %103 = vector.shape_cast %102 : vector<16xf32> to vector<16x1xf32>
    %104 = vector.broadcast %103 : vector<16x1xf32> to vector<16x8xf32>
    %105 = arith.subf %101, %104 : vector<16x8xf32>
    %106 = math.exp %105 : vector<16x8xf32>
    %cst_56 = arith.constant dense<0.000000e+00> : vector<16xf32>
    %107 = vector.multi_reduction <add>, %106, %cst_56 [1] : vector<16x8xf32> to vector<16xf32>
    %108 = vector.shape_cast %107 : vector<16xf32> to vector<16x1xf32>
    %109 = tpu.reciprocal %108 {approx = true} : vector<16x1xf32> -> vector<16x1xf32>
    %110 = vector.broadcast %109 : vector<16x1xf32> to vector<16x8xf32>
    %111 = arith.mulf %106, %110 : vector<16x8xf32>
    %112 = arith.truncf %111 : vector<16x8xf32> to vector<16x8xbf16>
    %113 = vector.extract_strided_slice %36 {offsets = [0, 24], sizes = [8, 8], strides = [1, 1]} : vector<8x32xbf16> to vector<8x8xbf16>
    %cst_57 = arith.constant dense<0.000000e+00> : vector<16x8xf32>
    %114 = tpu.matmul %112, %113, %cst_57 {dimension_numbers = #tpu.dot_dimension_numbers<[1], [0], [0], [1], [0, 0, 1, 1], [], []>} : vector<16x8xbf16>, vector<8x8xbf16>, vector<16x8xf32> -> vector<16x8xf32>
    %115 = arith.truncf %114 : vector<16x8xf32> to vector<16x8xbf16>
    %c3_58 = arith.constant 3 : index
    %c0_59 = arith.constant 0 : index
    %c0_60 = arith.constant 0 : index
    %116 = vector.load %arg5[%c3_58, %c0_59, %c0_60] : memref<4x8x32xbf16, #tpu.memory_space<vmem>>, vector<1x8x32xbf16>
    %117 = vector.shape_cast %116 : vector<1x8x32xbf16> to vector<8x32xbf16>
    %cst_61 = arith.constant dense<0.000000e+00> : vector<16x32xf32>
    %118 = tpu.matmul %115, %117, %cst_61 {dimension_numbers = #tpu.dot_dimension_numbers<[1], [0], [0], [1], [0, 0, 1, 1], [], []>} : vector<16x8xbf16>, vector<8x32xbf16>, vector<16x32xf32> -> vector<16x32xf32>
    %119 = arith.addf %98, %118 : vector<16x32xf32>
    %120 = vector.broadcast %27 : vector<1x32xf32> to vector<16x32xf32>
    %121 = arith.addf %119, %120 : vector<16x32xf32>
    %122 = arith.truncf %121 : vector<16x32xf32> to vector<16x32xbf16>
    %c0_62 = arith.constant 0 : index
    %c0_63 = arith.constant 0 : index
    %c0_64 = arith.constant 0 : index
    %123 = vector.load %arg9[%c0_62, %c0_63, %c0_64] : memref<1x16x32xbf16, #tpu.memory_space<vmem>>, vector<1x16x32xbf16>
    %124 = vector.shape_cast %123 : vector<1x16x32xbf16> to vector<16x32xbf16>
    %125 = vector.shape_cast %122 : vector<16x32xbf16> to vector<1x16x32xbf16>
    tpu.vector_store %arg9[%c0_62, %c0_63, %c0_64], %125 {strides = array<i32>} : memref<1x16x32xbf16, #tpu.memory_space<vmem>>, vector<1x16x32xbf16>,
    return
  }
  func.func @transform_0(%arg0: i32) -> (i32, i32, i32) {
    %c0_i32 = arith.constant 0 : i32
    %c0_i32_0 = arith.constant 0 : i32
    %c0_i32_1 = arith.constant 0 : i32
    return %arg0, %c0_i32, %c0_i32_0 : i32, i32, i32
  }
  func.func @transform_1(%arg0: i32) -> (i32, i32, i32) {
    %c0_i32 = arith.constant 0 : i32
    %c0_i32_0 = arith.constant 0 : i32
    %c0_i32_1 = arith.constant 0 : i32
    return %arg0, %c0_i32, %c0_i32_0 : i32, i32, i32
  }
  func.func @transform_2(%arg0: i32) -> (i32, i32, i32) {
    %c0_i32 = arith.constant 0 : i32
    %c0_i32_0 = arith.constant 0 : i32
    %c0_i32_1 = arith.constant 0 : i32
    return %arg0, %c0_i32, %c0_i32_0 : i32, i32, i32
  }
  func.func @transform_3(%arg0: i32) -> (i32, i32, i32) {
    %c0_i32 = arith.constant 0 : i32
    %c0_i32_0 = arith.constant 0 : i32
    %c0_i32_1 = arith.constant 0 : i32
    %c0_i32_2 = arith.constant 0 : i32
    return %c0_i32, %c0_i32_0, %c0_i32_1 : i32, i32, i32
  }
  func.func @transform_4(%arg0: i32) -> (i32, i32, i32) {
    %c0_i32 = arith.constant 0 : i32
    %c0_i32_0 = arith.constant 0 : i32
    %c0_i32_1 = arith.constant 0 : i32
    %c0_i32_2 = arith.constant 0 : i32
    return %c0_i32, %c0_i32_0, %c0_i32_1 : i32, i32, i32
  }
  func.func @transform_5(%arg0: i32) -> (i32, i32) {
    %c0_i32 = arith.constant 0 : i32
    %c0_i32_0 = arith.constant 0 : i32
    %c0_i32_1 = arith.constant 0 : i32
    return %c0_i32, %c0_i32_0 : i32, i32
  }
  func.func @transform_6(%arg0: i32) -> (i32, i32) {
    %c0_i32 = arith.constant 0 : i32
    %c0_i32_0 = arith.constant 0 : i32
    %c0_i32_1 = arith.constant 0 : i32
    return %c0_i32, %c0_i32_0 : i32, i32
  }
  func.func @transform_7(%arg0: i32) -> (i32, i32) {
    %c0_i32 = arith.constant 0 : i32
    %c0_i32_0 = arith.constant 0 : i32
    %c0_i32_1 = arith.constant 0 : i32
    return %c0_i32, %c0_i32_0 : i32, i32
  }
  func.func @transform_8(%arg0: i32) -> (i32, i32, i32) {
    %c0_i32 = arith.constant 0 : i32
    %c0_i32_0 = arith.constant 0 : i32
    %c0_i32_1 = arith.constant 0 : i32
    return %arg0, %c0_i32, %c0_i32_0 : i32, i32, i32
  }
}

module attributes {stable_mosaic.version = 11 : i64} {
  func.func @_crossattn_kernel(%arg0: i32, %arg1: memref<1x16x32xf32, #tpu.memory_space<vmem>>, %arg2: memref<1x16x32xf32, #tpu.memory_space<vmem>>, %arg3: memref<1x16x32xf32, #tpu.memory_space<vmem>>, %arg4: memref<3x32x32xbf16, #tpu.memory_space<vmem>>, %arg5: memref<4x8x32xbf16, #tpu.memory_space<vmem>>, %arg6: memref<4x32xf32, #tpu.memory_space<vmem>>, %arg7: memref<16x8xbf16, #tpu.memory_space<vmem>>, %arg8: memref<16x8xbf16, #tpu.memory_space<vmem>>, %arg9: memref<1x16x32xbf16, #tpu.memory_space<vmem>>) attributes {dimension_semantics = [#tpu.dimension_semantics<parallel>], iteration_bounds = array<i64: 2>, scalar_prefetch = 0 : i64, scratch_operands = 0 : i64, tpu.core_type = #tpu.core_type<tc>, window_params = [{transform_indices = @transform_0, window_bounds = array<i64: 1, 16, 32>}, {transform_indices = @transform_1, window_bounds = array<i64: 1, 16, 32>}, {transform_indices = @transform_2, window_bounds = array<i64: 1, 16, 32>}, {pipeline_mode = #tpu.pipeline_mode<synchronous>, transform_indices = @transform_3, window_bounds = array<i64: 3, 32, 32>}, {pipeline_mode = #tpu.pipeline_mode<synchronous>, transform_indices = @transform_4, window_bounds = array<i64: 4, 8, 32>}, {pipeline_mode = #tpu.pipeline_mode<synchronous>, transform_indices = @transform_5, window_bounds = array<i64: 4, 32>}, {pipeline_mode = #tpu.pipeline_mode<synchronous>, transform_indices = @transform_6, window_bounds = array<i64: 16, 8>}, {pipeline_mode = #tpu.pipeline_mode<synchronous>, transform_indices = @transform_7, window_bounds = array<i64: 16, 8>}, {transform_indices = @transform_8, window_bounds = array<i64: 1, 16, 32>}]} {
    %c0 = arith.constant 0 : index
    %c0_0 = arith.constant 0 : index
    %c0_1 = arith.constant 0 : index
    %0 = vector.load %arg1[%c0, %c0_0, %c0_1] : memref<1x16x32xf32, #tpu.memory_space<vmem>>, vector<1x16x32xf32>
    %1 = vector.shape_cast %0 : vector<1x16x32xf32> to vector<16x32xf32>
    %2 = arith.truncf %1 : vector<16x32xf32> to vector<16x32xbf16>
    %c0_2 = arith.constant 0 : index
    %c0_3 = arith.constant 0 : index
    %c0_4 = arith.constant 0 : index
    %3 = vector.load %arg2[%c0_2, %c0_3, %c0_4] : memref<1x16x32xf32, #tpu.memory_space<vmem>>, vector<1x16x32xf32>
    %4 = vector.shape_cast %3 : vector<1x16x32xf32> to vector<16x32xf32>
    %5 = arith.truncf %4 : vector<16x32xf32> to vector<16x32xbf16>
    %c0_5 = arith.constant 0 : index
    %c0_6 = arith.constant 0 : index
    %c0_7 = arith.constant 0 : index
    %6 = vector.load %arg3[%c0_5, %c0_6, %c0_7] : memref<1x16x32xf32, #tpu.memory_space<vmem>>, vector<1x16x32xf32>
    %7 = vector.shape_cast %6 : vector<1x16x32xf32> to vector<16x32xf32>
    %8 = arith.truncf %7 : vector<16x32xf32> to vector<16x32xbf16>
    %c0_8 = arith.constant 0 : index
    %c0_9 = arith.constant 0 : index
    %c0_10 = arith.constant 0 : index
    %9 = vector.load %arg4[%c0_8, %c0_9, %c0_10] : memref<3x32x32xbf16, #tpu.memory_space<vmem>>, vector<1x32x32xbf16>
    %10 = vector.shape_cast %9 : vector<1x32x32xbf16> to vector<32x32xbf16>
    %cst = arith.constant dense<0.000000e+00> : vector<16x32xf32>
    %11 = tpu.matmul %2, %10, %cst {dimension_numbers = #tpu.dot_dimension_numbers<[1], [0], [0], [1], [0, 0, 1, 1], [], []>} : vector<16x32xbf16>, vector<32x32xbf16>, vector<16x32xf32> -> vector<16x32xf32>
    %c0_11 = arith.constant 0 : index
    %c0_12 = arith.constant 0 : index
    %12 = vector.load %arg6[%c0_11, %c0_12] : memref<4x32xf32, #tpu.memory_space<vmem>>, vector<1x32xf32>
    %13 = vector.broadcast %12 : vector<1x32xf32> to vector<16x32xf32>
    %14 = arith.addf %11, %13 : vector<16x32xf32>
    %c1 = arith.constant 1 : index
    %c0_13 = arith.constant 0 : index
    %c0_14 = arith.constant 0 : index
    %15 = vector.load %arg4[%c1, %c0_13, %c0_14] : memref<3x32x32xbf16, #tpu.memory_space<vmem>>, vector<1x32x32xbf16>
    %16 = vector.shape_cast %15 : vector<1x32x32xbf16> to vector<32x32xbf16>
    %cst_15 = arith.constant dense<0.000000e+00> : vector<16x32xf32>
    %17 = tpu.matmul %5, %16, %cst_15 {dimension_numbers = #tpu.dot_dimension_numbers<[1], [0], [0], [1], [0, 0, 1, 1], [], []>} : vector<16x32xbf16>, vector<32x32xbf16>, vector<16x32xf32> -> vector<16x32xf32>
    %c1_16 = arith.constant 1 : index
    %c0_17 = arith.constant 0 : index
    %18 = vector.load %arg6[%c1_16, %c0_17] : memref<4x32xf32, #tpu.memory_space<vmem>>, vector<1x32xf32>
    %19 = vector.broadcast %18 : vector<1x32xf32> to vector<16x32xf32>
    %20 = arith.addf %17, %19 : vector<16x32xf32>
    %c2 = arith.constant 2 : index
    %c0_18 = arith.constant 0 : index
    %c0_19 = arith.constant 0 : index
    %21 = vector.load %arg4[%c2, %c0_18, %c0_19] : memref<3x32x32xbf16, #tpu.memory_space<vmem>>, vector<1x32x32xbf16>
    %22 = vector.shape_cast %21 : vector<1x32x32xbf16> to vector<32x32xbf16>
    %cst_20 = arith.constant dense<0.000000e+00> : vector<16x32xf32>
    %23 = tpu.matmul %8, %22, %cst_20 {dimension_numbers = #tpu.dot_dimension_numbers<[1], [0], [0], [1], [0, 0, 1, 1], [], []>} : vector<16x32xbf16>, vector<32x32xbf16>, vector<16x32xf32> -> vector<16x32xf32>
    %c2_21 = arith.constant 2 : index
    %c0_22 = arith.constant 0 : index
    %24 = vector.load %arg6[%c2_21, %c0_22] : memref<4x32xf32, #tpu.memory_space<vmem>>, vector<1x32xf32>
    %25 = vector.broadcast %24 : vector<1x32xf32> to vector<16x32xf32>
    %26 = arith.addf %23, %25 : vector<16x32xf32>
    %c3 = arith.constant 3 : index
    %c0_23 = arith.constant 0 : index
    %27 = vector.load %arg6[%c3, %c0_23] : memref<4x32xf32, #tpu.memory_space<vmem>>, vector<1x32xf32>
    %28 = arith.truncf %14 : vector<16x32xf32> to vector<16x32xbf16>
    %29 = arith.truncf %20 : vector<16x32xf32> to vector<16x32xbf16>
    %30 = arith.truncf %26 : vector<16x32xf32> to vector<16x32xbf16>
    %c0_24 = arith.constant 0 : index
    %c0_25 = arith.constant 0 : index
    %31 = vector.load %arg7[%c0_24, %c0_25] : memref<16x8xbf16, #tpu.memory_space<vmem>>, vector<16x8xbf16>
    %c0_26 = arith.constant 0 : index
    %c0_27 = arith.constant 0 : index
    %32 = vector.load %arg8[%c0_26, %c0_27] : memref<16x8xbf16, #tpu.memory_space<vmem>>, vector<16x8xbf16>
    %cst_28 = arith.constant dense<0.000000e+00> : vector<32x8xf32>
    %33 = tpu.matmul %29, %31, %cst_28 {dimension_numbers = #tpu.dot_dimension_numbers<[0], [0], [1], [1], [0, 1, 1, 1], [], []>} : vector<16x32xbf16>, vector<16x8xbf16>, vector<32x8xf32> -> vector<32x8xf32>
    %34 = arith.truncf %33 : vector<32x8xf32> to vector<32x8xbf16>
    %cst_29 = arith.constant dense<0.000000e+00> : vector<8x32xf32>
    %35 = tpu.matmul %32, %30, %cst_29 {dimension_numbers = #tpu.dot_dimension_numbers<[0], [0], [1], [1], [0, 1, 1, 1], [], []>} : vector<16x8xbf16>, vector<16x32xbf16>, vector<8x32xf32> -> vector<8x32xf32>
    %36 = arith.truncf %35 : vector<8x32xf32> to vector<8x32xbf16>
    %37 = vector.extract_strided_slice %28 {offsets = [0, 0], sizes = [16, 8], strides = [1, 1]} : vector<16x32xbf16> to vector<16x8xbf16>
    %38 = vector.extract_strided_slice %34 {offsets = [0, 0], sizes = [8, 8], strides = [1, 1]} : vector<32x8xbf16> to vector<8x8xbf16>
    %cst_30 = arith.constant dense<0.000000e+00> : vector<16x8xf32>
    %39 = tpu.matmul %37, %38, %cst_30 {dimension_numbers = #tpu.dot_dimension_numbers<[1], [0], [0], [1], [0, 0, 1, 1], [], []>} : vector<16x8xbf16>, vector<8x8xbf16>, vector<16x8xf32> -> vector<16x8xf32>
    %cst_31 = arith.constant dense<0xFF800000> : vector<16xf32>
    %40 = vector.multi_reduction <maximumf>, %39, %cst_31 [1] : vector<16x8xf32> to vector<16xf32>
    %41 = vector.shape_cast %40 : vector<16xf32> to vector<16x1xf32>
    %42 = vector.broadcast %41 : vector<16x1xf32> to vector<16x8xf32>
    %43 = arith.subf %39, %42 : vector<16x8xf32>
    %44 = math.exp %43 : vector<16x8xf32>
    %cst_32 = arith.constant dense<0.000000e+00> : vector<16xf32>
    %45 = vector.multi_reduction <add>, %44, %cst_32 [1] : vector<16x8xf32> to vector<16xf32>
    %46 = vector.shape_cast %45 : vector<16xf32> to vector<16x1xf32>
    %47 = tpu.reciprocal %46 {approx = true} : vector<16x1xf32> -> vector<16x1xf32>
    %48 = vector.broadcast %47 : vector<16x1xf32> to vector<16x8xf32>
    %49 = arith.mulf %44, %48 : vector<16x8xf32>
    %50 = arith.truncf %49 : vector<16x8xf32> to vector<16x8xbf16>
    %51 = vector.extract_strided_slice %36 {offsets = [0, 0], sizes = [8, 8], strides = [1, 1]} : vector<8x32xbf16> to vector<8x8xbf16>
    %cst_33 = arith.constant dense<0.000000e+00> : vector<16x8xf32>
    %52 = tpu.matmul %50, %51, %cst_33 {dimension_numbers = #tpu.dot_dimension_numbers<[1], [0], [0], [1], [0, 0, 1, 1], [], []>} : vector<16x8xbf16>, vector<8x8xbf16>, vector<16x8xf32> -> vector<16x8xf32>
    %53 = arith.truncf %52 : vector<16x8xf32> to vector<16x8xbf16>
    %c0_34 = arith.constant 0 : index
    %c0_35 = arith.constant 0 : index
    %c0_36 = arith.constant 0 : index
    %54 = vector.load %arg5[%c0_34, %c0_35, %c0_36] : memref<4x8x32xbf16, #tpu.memory_space<vmem>>, vector<1x8x32xbf16>
    %55 = vector.shape_cast %54 : vector<1x8x32xbf16> to vector<8x32xbf16>
    %cst_37 = arith.constant dense<0.000000e+00> : vector<16x32xf32>
    %56 = tpu.matmul %53, %55, %cst_37 {dimension_numbers = #tpu.dot_dimension_numbers<[1], [0], [0], [1], [0, 0, 1, 1], [], []>} : vector<16x8xbf16>, vector<8x32xbf16>, vector<16x32xf32> -> vector<16x32xf32>
    %57 = vector.extract_strided_slice %28 {offsets = [0, 8], sizes = [16, 8], strides = [1, 1]} : vector<16x32xbf16> to vector<16x8xbf16>
    %58 = vector.extract_strided_slice %34 {offsets = [8, 0], sizes = [8, 8], strides = [1, 1]} : vector<32x8xbf16> to vector<8x8xbf16>
    %cst_38 = arith.constant dense<0.000000e+00> : vector<16x8xf32>
    %59 = tpu.matmul %57, %58, %cst_38 {dimension_numbers = #tpu.dot_dimension_numbers<[1], [0], [0], [1], [0, 0, 1, 1], [], []>} : vector<16x8xbf16>, vector<8x8xbf16>, vector<16x8xf32> -> vector<16x8xf32>
    %cst_39 = arith.constant dense<0xFF800000> : vector<16xf32>
    %60 = vector.multi_reduction <maximumf>, %59, %cst_39 [1] : vector<16x8xf32> to vector<16xf32>
    %61 = vector.shape_cast %60 : vector<16xf32> to vector<16x1xf32>
    %62 = vector.broadcast %61 : vector<16x1xf32> to vector<16x8xf32>
    %63 = arith.subf %59, %62 : vector<16x8xf32>
    %64 = math.exp %63 : vector<16x8xf32>
    %cst_40 = arith.constant dense<0.000000e+00> : vector<16xf32>
    %65 = vector.multi_reduction <add>, %64, %cst_40 [1] : vector<16x8xf32> to vector<16xf32>
    %66 = vector.shape_cast %65 : vector<16xf32> to vector<16x1xf32>
    %67 = tpu.reciprocal %66 {approx = true} : vector<16x1xf32> -> vector<16x1xf32>
    %68 = vector.broadcast %67 : vector<16x1xf32> to vector<16x8xf32>
    %69 = arith.mulf %64, %68 : vector<16x8xf32>
    %70 = arith.truncf %69 : vector<16x8xf32> to vector<16x8xbf16>
    %71 = vector.extract_strided_slice %36 {offsets = [0, 8], sizes = [8, 8], strides = [1, 1]} : vector<8x32xbf16> to vector<8x8xbf16>
    %cst_41 = arith.constant dense<0.000000e+00> : vector<16x8xf32>
    %72 = tpu.matmul %70, %71, %cst_41 {dimension_numbers = #tpu.dot_dimension_numbers<[1], [0], [0], [1], [0, 0, 1, 1], [], []>} : vector<16x8xbf16>, vector<8x8xbf16>, vector<16x8xf32> -> vector<16x8xf32>
    %73 = arith.truncf %72 : vector<16x8xf32> to vector<16x8xbf16>
    %c1_42 = arith.constant 1 : index
    %c0_43 = arith.constant 0 : index
    %c0_44 = arith.constant 0 : index
    %74 = vector.load %arg5[%c1_42, %c0_43, %c0_44] : memref<4x8x32xbf16, #tpu.memory_space<vmem>>, vector<1x8x32xbf16>
    %75 = vector.shape_cast %74 : vector<1x8x32xbf16> to vector<8x32xbf16>
    %cst_45 = arith.constant dense<0.000000e+00> : vector<16x32xf32>
    %76 = tpu.matmul %73, %75, %cst_45 {dimension_numbers = #tpu.dot_dimension_numbers<[1], [0], [0], [1], [0, 0, 1, 1], [], []>} : vector<16x8xbf16>, vector<8x32xbf16>, vector<16x32xf32> -> vector<16x32xf32>
    %77 = arith.addf %56, %76 : vector<16x32xf32>
    %78 = vector.extract_strided_slice %28 {offsets = [0, 16], sizes = [16, 8], strides = [1, 1]} : vector<16x32xbf16> to vector<16x8xbf16>
    %79 = vector.extract_strided_slice %34 {offsets = [16, 0], sizes = [8, 8], strides = [1, 1]} : vector<32x8xbf16> to vector<8x8xbf16>
    %cst_46 = arith.constant dense<0.000000e+00> : vector<16x8xf32>
    %80 = tpu.matmul %78, %79, %cst_46 {dimension_numbers = #tpu.dot_dimension_numbers<[1], [0], [0], [1], [0, 0, 1, 1], [], []>} : vector<16x8xbf16>, vector<8x8xbf16>, vector<16x8xf32> -> vector<16x8xf32>
    %cst_47 = arith.constant dense<0xFF800000> : vector<16xf32>
    %81 = vector.multi_reduction <maximumf>, %80, %cst_47 [1] : vector<16x8xf32> to vector<16xf32>
    %82 = vector.shape_cast %81 : vector<16xf32> to vector<16x1xf32>
    %83 = vector.broadcast %82 : vector<16x1xf32> to vector<16x8xf32>
    %84 = arith.subf %80, %83 : vector<16x8xf32>
    %85 = math.exp %84 : vector<16x8xf32>
    %cst_48 = arith.constant dense<0.000000e+00> : vector<16xf32>
    %86 = vector.multi_reduction <add>, %85, %cst_48 [1] : vector<16x8xf32> to vector<16xf32>
    %87 = vector.shape_cast %86 : vector<16xf32> to vector<16x1xf32>
    %88 = tpu.reciprocal %87 {approx = true} : vector<16x1xf32> -> vector<16x1xf32>
    %89 = vector.broadcast %88 : vector<16x1xf32> to vector<16x8xf32>
    %90 = arith.mulf %85, %89 : vector<16x8xf32>
    %91 = arith.truncf %90 : vector<16x8xf32> to vector<16x8xbf16>
    %92 = vector.extract_strided_slice %36 {offsets = [0, 16], sizes = [8, 8], strides = [1, 1]} : vector<8x32xbf16> to vector<8x8xbf16>
    %cst_49 = arith.constant dense<0.000000e+00> : vector<16x8xf32>
    %93 = tpu.matmul %91, %92, %cst_49 {dimension_numbers = #tpu.dot_dimension_numbers<[1], [0], [0], [1], [0, 0, 1, 1], [], []>} : vector<16x8xbf16>, vector<8x8xbf16>, vector<16x8xf32> -> vector<16x8xf32>
    %94 = arith.truncf %93 : vector<16x8xf32> to vector<16x8xbf16>
    %c2_50 = arith.constant 2 : index
    %c0_51 = arith.constant 0 : index
    %c0_52 = arith.constant 0 : index
    %95 = vector.load %arg5[%c2_50, %c0_51, %c0_52] : memref<4x8x32xbf16, #tpu.memory_space<vmem>>, vector<1x8x32xbf16>
    %96 = vector.shape_cast %95 : vector<1x8x32xbf16> to vector<8x32xbf16>
    %cst_53 = arith.constant dense<0.000000e+00> : vector<16x32xf32>
    %97 = tpu.matmul %94, %96, %cst_53 {dimension_numbers = #tpu.dot_dimension_numbers<[1], [0], [0], [1], [0, 0, 1, 1], [], []>} : vector<16x8xbf16>, vector<8x32xbf16>, vector<16x32xf32> -> vector<16x32xf32>
    %98 = arith.addf %77, %97 : vector<16x32xf32>
    %99 = vector.extract_strided_slice %28 {offsets = [0, 24], sizes = [16, 8], strides = [1, 1]} : vector<16x32xbf16> to vector<16x8xbf16>
    %100 = vector.extract_strided_slice %34 {offsets = [24, 0], sizes = [8, 8], strides = [1, 1]} : vector<32x8xbf16> to vector<8x8xbf16>
    %cst_54 = arith.constant dense<0.000000e+00> : vector<16x8xf32>
    %101 = tpu.matmul %99, %100, %cst_54 {dimension_numbers = #tpu.dot_dimension_numbers<[1], [0], [0], [1], [0, 0, 1, 1], [], []>} : vector<16x8xbf16>, vector<8x8xbf16>, vector<16x8xf32> -> vector<16x8xf32>
    %cst_55 = arith.constant dense<0xFF800000> : vector<16xf32>
    %102 = vector.multi_reduction <maximumf>, %101, %cst_55 [1] : vector<16x8xf32> to vector<16xf32>
    %103 = vector.shape_cast %102 : vector<16xf32> to vector<16x1xf32>
    %104 = vector.broadcast %103 : vector<16x1xf32> to vector<16x8xf32>
    %105 = arith.subf %101, %104 : vector<16x8xf32>
    %106 = math.exp %105 : vector<16x8xf32>
    %cst_56 = arith.constant dense<0.000000e+00> : vector<16xf32>
    %107 = vector.multi_reduction <add>, %106, %cst_56 [1] : vector<16x8xf32> to vector<16xf32>
    %108 = vector.shape_cast %107 : vector<16xf32> to vector<16x1xf32>
    %109 = tpu.reciprocal %108 {approx = true} : vector<16x1xf32> -> vector<16x1xf32>
    %110 = vector.broadcast %109 : vector<16x1xf32> to vector<16x8xf32>
    %111 = arith.mulf %106, %110 : vector<16x8xf32>
    %112 = arith.truncf %111 : vector<16x8xf32> to vector<16x8xbf16>
    %113 = vector.extract_strided_slice %36 {offsets = [0, 24], sizes = [8, 8], strides = [1, 1]} : vector<8x32xbf16> to vector<8x8xbf16>
    %cst_57 = arith.constant dense<0.000000e+00> : vector<16x8xf32>
    %114 = tpu.matmul %112, %113, %cst_57 {dimension_numbers = #tpu.dot_dimension_numbers<[1], [0], [0], [1], [0, 0, 1, 1], [], []>} : vector<16x8xbf16>, vector<8x8xbf16>, vector<16x8xf32> -> vector<16x8xf32>
    %115 = arith.truncf %114 : vector<16x8xf32> to vector<16x8xbf16>
    %c3_58 = arith.constant 3 : index
    %c0_59 = arith.constant 0 : index
    %c0_60 = arith.constant 0 : index
    %116 = vector.load %arg5[%c3_58, %c0_59, %c0_60] : memref<4x8x32xbf16, #tpu.memory_space<vmem>>, vector<1x8x32xbf16>
    %117 = vector.shape_cast %116 : vector<1x8x32xbf16> to vector<8x32xbf16>
    %cst_61 = arith.constant dense<0.000000e+00> : vector<16x32xf32>
    %118 = tpu.matmul %115, %117, %cst_61 {dimension_numbers = #tpu.dot_dimension_numbers<[1], [0], [0], [1], [0, 0, 1, 1], [], []>} : vector<16x8xbf16>, vector<8x32xbf16>, vector<16x32xf32> -> vector<16x32xf32>
    %119 = arith.addf %98, %118 : vector<16x32xf32>
    %120 = vector.broadcast %27 : vector<1x32xf32> to vector<16x32xf32>
    %121 = arith.addf %119, %120 : vector<16x32xf32>
    %122 = arith.truncf %121 : vector<16x32xf32> to vector<16x32xbf16>
    %c0_62 = arith.constant 0 : index
    %c0_63 = arith.constant 0 : index
    %c0_64 = arith.constant 0 : index
    %123 = vector.load %arg9[%c0_62, %c0_63, %c0_64] : memref<1x16x32xbf16, #tpu.memory_space<vmem>>, vector<1x16x32xbf16>
    %124 = vector.shape_cast %123 : vector<1x16x32xbf16> to vector<16x32xbf16>
    %125 = vector.shape_cast %122 : vector<16x32xbf16> to vector<1x16x32xbf16>
    tpu.vector_store %arg9[%c0_62, %c0_63, %c0_64], %125 {strides = array<i32>} : memref<1x16x32xbf16, #tpu.memory_space<vmem>>, vector<1x16x32xbf16>,
    return
  }
  func.func @transform_0(%arg0: i32) -> (i32, i32, i32) {
    %c0_i32 = arith.constant 0 : i32
    %c0_i32_0 = arith.constant 0 : i32
    %c0_i32_1 = arith.constant 0 : i32
    return %arg0, %c0_i32, %c0_i32_0 : i32, i32, i32
  }
  func.func @transform_1(%arg0: i32) -> (i32, i32, i32) {
    %c0_i32 = arith.constant 0 : i32
    %c0_i32_0 = arith.constant 0 : i32
    %c0_i32_1 = arith.constant 0 : i32
    return %arg0, %c0_i32, %c0_i32_0 : i32, i32, i32
  }
  func.func @transform_2(%arg0: i32) -> (i32, i32, i32) {
    %c0_i32 = arith.constant 0 : i32
    %c0_i32_0 = arith.constant 0 : i32
    %c0_i32_1 = arith.constant 0 : i32
    return %arg0, %c0_i32, %c0_i32_0 : i32, i32, i32
  }
  func.func @transform_3(%arg0: i32) -> (i32, i32, i32) {
    %c0_i32 = arith.constant 0 : i32
    %c0_i32_0 = arith.constant 0 : i32
    %c0_i32_1 = arith.constant 0 : i32
    %c0_i32_2 = arith.constant 0 : i32
    return %c0_i32, %c0_i32_0, %c0_i32_1 : i32, i32, i32
  }
  func.func @transform_4(%arg0: i32) -> (i32, i32, i32) {
    %c0_i32 = arith.constant 0 : i32
    %c0_i32_0 = arith.constant 0 : i32
    %c0_i32_1 = arith.constant 0 : i32
    %c0_i32_2 = arith.constant 0 : i32
    return %c0_i32, %c0_i32_0, %c0_i32_1 : i32, i32, i32
  }
  func.func @transform_5(%arg0: i32) -> (i32, i32) {
    %c0_i32 = arith.constant 0 : i32
    %c0_i32_0 = arith.constant 0 : i32
    %c0_i32_1 = arith.constant 0 : i32
    return %c0_i32, %c0_i32_0 : i32, i32
  }
  func.func @transform_6(%arg0: i32) -> (i32, i32) {
    %c0_i32 = arith.constant 0 : i32
    %c0_i32_0 = arith.constant 0 : i32
    %c0_i32_1 = arith.constant 0 : i32
    return %c0_i32, %c0_i32_0 : i32, i32
  }
  func.func @transform_7(%arg0: i32) -> (i32, i32) {
    %c0_i32 = arith.constant 0 : i32
    %c0_i32_0 = arith.constant 0 : i32
    %c0_i32_1 = arith.constant 0 : i32
    return %c0_i32, %c0_i32_0 : i32, i32
  }
  func.func @transform_8(%arg0: i32) -> (i32, i32, i32) {
    %c0_i32 = arith.constant 0 : i32
    %c0_i32_0 = arith.constant 0 : i32
    %c0_i32_1 = arith.constant 0 : i32
    return %arg0, %c0_i32, %c0_i32_0 : i32, i32, i32
  }
}

</mosaic_0001>

<llo_original>
// kernel: tpu_custom_call.1
$region0: #{tpu_custom_call.1}
  #allocation0 [shape = 'u32[]', space=smem, size = 0x4, offset = 0x4, fixed_abs, tag = 'smem constant byte address 0x4 - core index']
  #allocation1 [shape = 'u32[72,128]{1,0:T(1,128)}', space=vmem, size = 0x9000, scoped, tag = 'internal scratch']
  %s0 = inlined_call_operand.hbm [shape: f32[2,16,32], index: 0, kind: input, shape index: {}]
  %s1 = inlined_call_operand.hbm [shape: f32[2,16,32], index: 1, kind: input, shape index: {}]
  %s2 = inlined_call_operand.hbm [shape: f32[2,16,32], index: 2, kind: input, shape index: {}]
  %s3 = inlined_call_operand.hbm [shape: bf16[3,32,32], index: 3, kind: input, shape index: {}]
  %s4 = inlined_call_operand.vmem [shape: bf16[4,8,32], index: 4, kind: input, shape index: {}]
  %s5 = inlined_call_operand.vmem [shape: f32[4,32], index: 5, kind: input, shape index: {}]
  %s6 = inlined_call_operand.vmem [shape: bf16[16,8], index: 6, kind: input, shape index: {}]
  %s7 = inlined_call_operand.vmem [shape: bf16[16,8], index: 7, kind: input, shape index: {}]
  %s8 = inlined_call_operand.hbm [shape: bf16[2,16,32], index: 8, kind: output, shape index: {}]
  %s9 = sld [smem:[#allocation0]]
  $region81: #{tpu_custom_call.1} parent=0
    _
  %s11 = ssub.s32 1, %s9
  %s12 = scalar_select 0, %s11, %s9
  $region1: #{tpu_custom_call.1} parent=0
    #allocation2 [shape = 'u8[16384]{0}', space=vmem, size = 0x4000, scoped, tag = 'input window, operand 0']
    #allocation3 [shape = 's32[2]{0}', space=sflag, size = 0x8, scoped, tag = 'scoped memory for tpu_custom_call.1']
    #allocation4 [shape = 's32[2]{0}', space=sflag, size = 0x8, scoped, tag = 'scoped memory for tpu_custom_call.1']
    #allocation5 [shape = 'u8[16384]{0}', space=vmem, size = 0x4000, scoped, tag = 'input window, operand 1']
    #allocation6 [shape = 's32[2]{0}', space=sflag, size = 0x8, scoped, tag = 'scoped memory for tpu_custom_call.1']
    #allocation7 [shape = 'u8[16384]{0}', space=vmem, size = 0x4000, scoped, tag = 'input window, operand 2']
    #allocation8 [shape = 'u8[24576]{0}', space=vmem, size = 0x6000, scoped, tag = 'input window, operand 3, single buffered']
    #allocation9 [shape = 's32[1]{0}', space=sflag, size = 0x4, scoped, tag = 'scoped memory for tpu_custom_call.1']
    #allocation10 [shape = 'u8[8192]{0}', space=vmem, size = 0x2000, scoped, tag = 'output window, operand 0']
    %13 = vsyncpa [#allocation3], 0
    %s14 = scalar_lea.sflag [#allocation3], 1
    %15 = vsyncpa %s14, 0
    %16 = vsyncpa [#allocation6], 0
    %s17 = scalar_lea.sflag [#allocation6], 1
    %18 = vsyncpa %s17, 0
    %19 = vsyncpa [#allocation9], 0
    %20 = vsyncpa [#allocation4], 0
    %s21 = scalar_lea.sflag [#allocation4], 1
    %22 = vsyncpa %s21, 0
    loop: start=0, step=1, limit=4
    $region2: #{tpu_custom_call.1} parent=1 // loop_pre_header
      _
    $region3: #{tpu_custom_call.1} parent=1 // loop_header
      %s24 = sphi 0, %s28
      %p25 = scmp.ge.s32.totalorder %s24, 4
      %s34 = sphi 0, %s36
      %s37 = sphi 0, %s34
      %s38 = sphi 0, %s37
      %s54 = sphi 0, %s38
      %s60 = sphi 0, %s62
      %s63 = sphi 0, %s60
      %s64 = sphi 0, %s63
      %s80 = sphi 0, %s64
      %s86 = sphi 0, %s88
      %s89 = sphi 0, %s86
      %s90 = sphi 0, %s89
      %s106 = sphi 0, %s90
      %s110 = sphi 0, %s110
      %s112 = sphi 0, %s110
      %s113 = sphi 0, %s112
      %s127 = sphi 0, %s113
      %s131 = sphi 0, %s131
      %s133 = sphi 0, %s131
      %s134 = sphi 0, %s133
      %s148 = sphi 0, %s134
      %s152 = sphi 0, %s152
      %s154 = sphi 0, %s152
      %s155 = sphi 0, %s154
      %s169 = sphi 0, %s155
      %s173 = sphi 0, %s173
      %s175 = sphi 0, %s173
      %s176 = sphi 0, %s175
      %s190 = sphi 0, %s176
      %s194 = sphi 0, %s194
      %s196 = sphi 0, %s194
      %s197 = sphi 0, %s196
      %s211 = sphi 0, %s197
      %s217 = sphi 0, %s219
      %s220 = sphi 0, %s217
      %s221 = sphi 0, %s220
      %s237 = sphi 0, %s221
    $region4: #{tpu_custom_call.1} parent=1 // loop_header_branch
      %27 = sbr.rel (%p25) target = $region8
    $region5: #{tpu_custom_call.1} parent=1 // loop_body
      %s29 = ssub.s32 %s24, 1
      %s30 = ssub.s32 %s24, 2
      %s31 = sadd.s32 %s24, 1
      %s32 = ssub.s32 %s24, %s31
      %p33 = scmp.eq.s32.totalorder %s32, 0
      %s35 = sadd.s32 %s34, 1
      %s36 = scalar_select %p33, %s34, %s35
      %p39 = pneg %p33
      %p40 = scmp.eq.s32.totalorder %s24, 1
      %p41 = por %p39, %p40
      %p42 = scmp.ne.s32.totalorder %s34, %s37
      %p43 = scmp.eq.s32.totalorder %s24, 0
      %p44 = por %p42, %p43
      %p45 = scmp.ne.s32.totalorder %s34, %s37
      %p46 = scmp.eq.s32.totalorder %s29, 1
      %p47 = por %p45, %p46
      %p48 = scmp.ne.s32.totalorder %s37, %s38
      %p49 = scmp.eq.s32.totalorder %s29, 0
      %p50 = por %p48, %p49
      %p51 = scmp.ne.s32.totalorder %s37, %s38
      %p52 = scmp.eq.s32.totalorder %s30, 1
      %p53 = por %p51, %p52
      %p55 = scmp.ne.s32.totalorder %s38, %s54
      %p56 = scmp.eq.s32.totalorder %s30, 0
      %p57 = por %p55, %p56
      %s58 = ssub.s32 %s24, %s31
      %p59 = scmp.eq.s32.totalorder %s58, 0
      %s61 = sadd.s32 %s60, 1
      %s62 = scalar_select %p59, %s60, %s61
      %p65 = pneg %p59
      %p66 = scmp.eq.s32.totalorder %s24, 1
      %p67 = por %p65, %p66
      %p68 = scmp.ne.s32.totalorder %s60, %s63
      %p69 = scmp.eq.s32.totalorder %s24, 0
      %p70 = por %p68, %p69
      %p71 = scmp.ne.s32.totalorder %s60, %s63
      %p72 = scmp.eq.s32.totalorder %s29, 1
      %p73 = por %p71, %p72
      %p74 = scmp.ne.s32.totalorder %s63, %s64
      %p75 = scmp.eq.s32.totalorder %s29, 0
      %p76 = por %p74, %p75
      %p77 = scmp.ne.s32.totalorder %s63, %s64
      %p78 = scmp.eq.s32.totalorder %s30, 1
      %p79 = por %p77, %p78
      %p81 = scmp.ne.s32.totalorder %s64, %s80
      %p82 = scmp.eq.s32.totalorder %s30, 0
      %p83 = por %p81, %p82
      %s84 = ssub.s32 %s24, %s31
      %p85 = scmp.eq.s32.totalorder %s84, 0
      %s87 = sadd.s32 %s86, 1
      %s88 = scalar_select %p85, %s86, %s87
      %p91 = pneg %p85
      %p92 = scmp.eq.s32.totalorder %s24, 1
      %p93 = por %p91, %p92
      %p94 = scmp.ne.s32.totalorder %s86, %s89
      %p95 = scmp.eq.s32.totalorder %s24, 0
      %p96 = por %p94, %p95
      %p97 = scmp.ne.s32.totalorder %s86, %s89
      %p98 = scmp.eq.s32.totalorder %s29, 1
      %p99 = por %p97, %p98
      %p100 = scmp.ne.s32.totalorder %s89, %s90
      %p101 = scmp.eq.s32.totalorder %s29, 0
      %p102 = por %p100, %p101
      %p103 = scmp.ne.s32.totalorder %s89, %s90
      %p104 = scmp.eq.s32.totalorder %s30, 1
      %p105 = por %p103, %p104
      %p107 = scmp.ne.s32.totalorder %s90, %s106
      %p108 = scmp.eq.s32.totalorder %s30, 0
      %p109 = por %p107, %p108
      %s111 = sadd.s32 %s110, 1
      %p114 = scmp.eq.s32.totalorder %s24, 1
      %p115 = scmp.ne.s32.totalorder %s110, %s112
      %p116 = scmp.eq.s32.totalorder %s24, 0
      %p117 = por %p115, %p116
      %p118 = scmp.ne.s32.totalorder %s110, %s112
      %p119 = scmp.eq.s32.totalorder %s29, 1
      %p120 = por %p118, %p119
      %p121 = scmp.ne.s32.totalorder %s112, %s113
      %p122 = scmp.eq.s32.totalorder %s29, 0
      %p123 = por %p121, %p122
      %p124 = scmp.ne.s32.totalorder %s112, %s113
      %p125 = scmp.eq.s32.totalorder %s30, 1
      %p126 = por %p124, %p125
      %p128 = scmp.ne.s32.totalorder %s113, %s127
      %p129 = scmp.eq.s32.totalorder %s30, 0
      %p130 = por %p128, %p129
      %s132 = sadd.s32 %s131, 1
      %p135 = scmp.eq.s32.totalorder %s24, 1
      %p136 = scmp.ne.s32.totalorder %s131, %s133
      %p137 = scmp.eq.s32.totalorder %s24, 0
      %p138 = por %p136, %p137
      %p139 = scmp.ne.s32.totalorder %s131, %s133
      %p140 = scmp.eq.s32.totalorder %s29, 1
      %p141 = por %p139, %p140
      %p142 = scmp.ne.s32.totalorder %s133, %s134
      %p143 = scmp.eq.s32.totalorder %s29, 0
      %p144 = por %p142, %p143
      %p145 = scmp.ne.s32.totalorder %s133, %s134
      %p146 = scmp.eq.s32.totalorder %s30, 1
      %p147 = por %p145, %p146
      %p149 = scmp.ne.s32.totalorder %s134, %s148
      %p150 = scmp.eq.s32.totalorder %s30, 0
      %p151 = por %p149, %p150
      %s153 = sadd.s32 %s152, 1
      %p156 = scmp.eq.s32.totalorder %s24, 1
      %p157 = scmp.ne.s32.totalorder %s152, %s154
      %p158 = scmp.eq.s32.totalorder %s24, 0
      %p159 = por %p157, %p158
      %p160 = scmp.ne.s32.totalorder %s152, %s154
      %p161 = scmp.eq.s32.totalorder %s29, 1
      %p162 = por %p160, %p161
      %p163 = scmp.ne.s32.totalorder %s154, %s155
      %p164 = scmp.eq.s32.totalorder %s29, 0
      %p165 = por %p163, %p164
      %p166 = scmp.ne.s32.totalorder %s154, %s155
      %p167 = scmp.eq.s32.totalorder %s30, 1
      %p168 = por %p166, %p167
      %p170 = scmp.ne.s32.totalorder %s155, %s169
      %p171 = scmp.eq.s32.totalorder %s30, 0
      %p172 = por %p170, %p171
      %s174 = sadd.s32 %s173, 1
      %p177 = scmp.eq.s32.totalorder %s24, 1
      %p178 = scmp.ne.s32.totalorder %s173, %s175
      %p179 = scmp.eq.s32.totalorder %s24, 0
      %p180 = por %p178, %p179
      %p181 = scmp.ne.s32.totalorder %s173, %s175
      %p182 = scmp.eq.s32.totalorder %s29, 1
      %p183 = por %p181, %p182
      %p184 = scmp.ne.s32.totalorder %s175, %s176
      %p185 = scmp.eq.s32.totalorder %s29, 0
      %p186 = por %p184, %p185
      %p187 = scmp.ne.s32.totalorder %s175, %s176
      %p188 = scmp.eq.s32.totalorder %s30, 1
      %p189 = por %p187, %p188
      %p191 = scmp.ne.s32.totalorder %s176, %s190
      %p192 = scmp.eq.s32.totalorder %s30, 0
      %p193 = por %p191, %p192
      %s195 = sadd.s32 %s194, 1
      %p198 = scmp.eq.s32.totalorder %s24, 1
      %p199 = scmp.ne.s32.totalorder %s194, %s196
      %p200 = scmp.eq.s32.totalorder %s24, 0
      %p201 = por %p199, %p200
      %p202 = scmp.ne.s32.totalorder %s194, %s196
      %p203 = scmp.eq.s32.totalorder %s29, 1
      %p204 = por %p202, %p203
      %p205 = scmp.ne.s32.totalorder %s196, %s197
      %p206 = scmp.eq.s32.totalorder %s29, 0
      %p207 = por %p205, %p206
      %p208 = scmp.ne.s32.totalorder %s196, %s197
      %p209 = scmp.eq.s32.totalorder %s30, 1
      %p210 = por %p208, %p209
      %p212 = scmp.ne.s32.totalorder %s197, %s211
      %p213 = scmp.eq.s32.totalorder %s30, 0
      %p214 = por %p212, %p213
      %s215 = ssub.s32 %s24, %s31
      %p216 = scmp.eq.s32.totalorder %s215, 0
      %s218 = sadd.s32 %s217, 1
      %s219 = scalar_select %p216, %s217, %s218
      %p222 = pneg %p216
      %p223 = scmp.eq.s32.totalorder %s24, 1
      %p224 = por %p222, %p223
      %p225 = scmp.ne.s32.totalorder %s217, %s220
      %p226 = scmp.eq.s32.totalorder %s24, 0
      %p227 = por %p225, %p226
      %p228 = scmp.ne.s32.totalorder %s217, %s220
      %p229 = scmp.eq.s32.totalorder %s29, 1
      %p230 = por %p228, %p229
      %p231 = scmp.ne.s32.totalorder %s220, %s221
      %p232 = scmp.eq.s32.totalorder %s29, 0
      %p233 = por %p231, %p232
      %p234 = scmp.ne.s32.totalorder %s220, %s221
      %p235 = scmp.eq.s32.totalorder %s30, 1
      %p236 = por %p234, %p235
      %p238 = scmp.ne.s32.totalorder %s221, %s237
      %p239 = scmp.eq.s32.totalorder %s30, 0
      %p240 = por %p238, %p239
      %p241 = scmp.le.s32.totalorder 1, %s24
      %p242 = scmp.lt.s32.totalorder %s24, 3
      %p243 = pnand %p241, %p242
      %p244 = pneg %p243
      // Predicated region
      $region9: #{tpu_custom_call.1} parent=5 // pred_check
        _
      $region10: #{tpu_custom_call.1} parent=5 // pred_check_branch
        %246 = sbr.rel (%p243) target = $region12
      $region11: #{tpu_custom_call.1} parent=5 // pred_region
        %s247 = ssub.s32 %s24, 1
        // Predicated region
        $region13: #{tpu_custom_call.1} parent=11 // pred_check
          %p248 = pneg %p123
        $region14: #{tpu_custom_call.1} parent=11 // pred_check_branch
          %250 = sbr.rel (%p248) target = $region16
        $region15: #{tpu_custom_call.1} parent=11 // pred_region
          %252 = vsyncadd [#allocation9], 0
          %s253 = sshll.u32 %s3, 4
          %s254 = int_to_ptr.hbm [resolvable:$true] %s253
          %s255 = sshll.u32 [#allocation8], 4
          %s256 = int_to_ptr.vmem [resolvable:$true] %s255
          %261 = dma.hbm_to_vmem [thread:$0]  %s254, 768, %s256, [#allocation9], 64, 64, 4
        $region16: #{tpu_custom_call.1} parent=11 // pred_fallthru
          _
        // Predicated region
        $region17: #{tpu_custom_call.1} parent=11 // pred_check
          %p262 = pneg %p144
        $region18: #{tpu_custom_call.1} parent=11 // pred_check_branch
          %264 = sbr.rel (%p262) target = $region20
        $region19: #{tpu_custom_call.1} parent=11 // pred_region
          _
        $region20: #{tpu_custom_call.1} parent=11 // pred_fallthru
          _
        // Predicated region
        $region21: #{tpu_custom_call.1} parent=11 // pred_check
          %p265 = pneg %p165
        $region22: #{tpu_custom_call.1} parent=11 // pred_check_branch
          %267 = sbr.rel (%p265) target = $region24
        $region23: #{tpu_custom_call.1} parent=11 // pred_region
          _
        $region24: #{tpu_custom_call.1} parent=11 // pred_fallthru
          _
        // Predicated region
        $region25: #{tpu_custom_call.1} parent=11 // pred_check
          %p268 = pneg %p186
        $region26: #{tpu_custom_call.1} parent=11 // pred_check_branch
          %270 = sbr.rel (%p268) target = $region28
        $region27: #{tpu_custom_call.1} parent=11 // pred_region
          _
        $region28: #{tpu_custom_call.1} parent=11 // pred_fallthru
          _
        // Predicated region
        $region29: #{tpu_custom_call.1} parent=11 // pred_check
          %p271 = pneg %p207
        $region30: #{tpu_custom_call.1} parent=11 // pred_check_branch
          %273 = sbr.rel (%p271) target = $region32
        $region31: #{tpu_custom_call.1} parent=11 // pred_region
          _
        $region32: #{tpu_custom_call.1} parent=11 // pred_fallthru
          _
      $region12: #{tpu_custom_call.1} parent=5 // pred_fallthru
        _
      %p274 = scmp.lt.s32.totalorder %s24, 2
      // Predicated region
      $region33: #{tpu_custom_call.1} parent=5 // pred_check
        %p275 = pneg %p274
      $region34: #{tpu_custom_call.1} parent=5 // pred_check_branch
        %277 = sbr.rel (%p275) target = $region36
      $region35: #{tpu_custom_call.1} parent=5 // pred_region
        // Predicated region
        $region37: #{tpu_custom_call.1} parent=35 // pred_check
          %p278 = pneg %p44
        $region38: #{tpu_custom_call.1} parent=35 // pred_check_branch
          %280 = sbr.rel (%p278) target = $region40
        $region39: #{tpu_custom_call.1} parent=35 // pred_region
          %s281 = sand.u32 %s34, 1
          %s282 = scalar_lea.sflag [#allocation3], %s281
          %s283 = sand.u32 %s34, 1
          %s284 = smul.addr %s283, 16
          %s285 = scalar_lea.vmem [#allocation2], %s284
          %287 = vsyncadd %s282, 0
          %s288 = smul.addr %s24, 2
          %s289 = smul.addr %s288, 8
          %s290 = scalar_lea.hbm %s0, %s289
          %s291 = sshll.u32 %s290, 4
          %s292 = int_to_ptr.hbm [resolvable:$true] %s291
          %s293 = sshll.u32 %s285, 4
          %s294 = int_to_ptr.vmem [resolvable:$true] %s293
          %299 = dma.hbm_to_vmem [thread:$0]  %s292, 256, %s294, %s282, 128, 128, 8
        $region40: #{tpu_custom_call.1} parent=35 // pred_fallthru
          _
        // Predicated region
        $region41: #{tpu_custom_call.1} parent=35 // pred_check
          %p300 = pneg %p70
        $region42: #{tpu_custom_call.1} parent=35 // pred_check_branch
          %302 = sbr.rel (%p300) target = $region44
        $region43: #{tpu_custom_call.1} parent=35 // pred_region
          %s303 = sand.u32 %s24, 1
          %s304 = scalar_lea.sflag [#allocation6], %s303
          %s305 = sand.u32 %s60, 1
          %s306 = smul.addr %s305, 16
          %s307 = scalar_lea.vmem [#allocation5], %s306
          %309 = vsyncadd %s304, 0
          %s310 = smul.addr %s24, 2
          %s311 = smul.addr %s310, 8
          %s312 = scalar_lea.hbm %s1, %s311
          %s313 = sshll.u32 %s312, 4
          %s314 = int_to_ptr.hbm [resolvable:$true] %s313
          %s315 = sshll.u32 %s307, 4
          %s316 = int_to_ptr.vmem [resolvable:$true] %s315
          %321 = dma.hbm_to_vmem [thread:$0]  %s314, 256, %s316, %s304, 128, 128, 8
        $region44: #{tpu_custom_call.1} parent=35 // pred_fallthru
          _
        // Predicated region
        $region45: #{tpu_custom_call.1} parent=35 // pred_check
          %p322 = pneg %p96
        $region46: #{tpu_custom_call.1} parent=35 // pred_check_branch
          %324 = sbr.rel (%p322) target = $region48
        $region47: #{tpu_custom_call.1} parent=35 // pred_region
          %s325 = sand.u32 %s24, 1
          %s326 = scalar_lea.sflag [#allocation6], %s325
          %s327 = sand.u32 %s86, 1
          %s328 = smul.addr %s327, 16
          %s329 = scalar_lea.vmem [#allocation7], %s328
          %331 = vsyncadd %s326, 0
          %s332 = smul.addr %s24, 2
          %s333 = smul.addr %s332, 8
          %s334 = scalar_lea.hbm %s2, %s333
          %s335 = sshll.u32 %s334, 4
          %s336 = int_to_ptr.hbm [resolvable:$true] %s335
          %s337 = sshll.u32 %s329, 4
          %s338 = int_to_ptr.vmem [resolvable:$true] %s337
          %343 = dma.hbm_to_vmem [thread:$0]  %s336, 256, %s338, %s326, 128, 128, 8
        $region48: #{tpu_custom_call.1} parent=35 // pred_fallthru
          _
      $region36: #{tpu_custom_call.1} parent=5 // pred_fallthru
        _
      %p344 = scmp.le.s32.totalorder 1, %s24
      %p345 = scmp.lt.s32.totalorder %s24, 3
      %p346 = pnand %p344, %p345
      %p347 = pneg %p346
      // Predicated region
      $region49: #{tpu_custom_call.1} parent=5 // pred_check
        _
      $region50: #{tpu_custom_call.1} parent=5 // pred_check_branch
        %349 = sbr.rel (%p346) target = $region52
      $region51: #{tpu_custom_call.1} parent=5 // pred_region
        %s350 = ssub.s32 %s24, 1
        %s351 = sand.u32 %s37, 1
        %s352 = scalar_lea.sflag [#allocation3], %s351
        %s353 = sand.u32 %s37, 1
        %s354 = smul.addr %s353, 16
        %s355 = scalar_lea.vmem [#allocation2], %s354
        // Predicated region
        $region53: #{tpu_custom_call.1} parent=51 // pred_check
          %p356 = pneg %p50
        $region54: #{tpu_custom_call.1} parent=51 // pred_check_branch
          %358 = sbr.rel (%p356) target = $region56
        $region55: #{tpu_custom_call.1} parent=51 // pred_region
          %360 = dma.done %s352, 256
        $region56: #{tpu_custom_call.1} parent=51 // pred_fallthru
          _
        %s361 = sand.u32 %s29, 1
        %s362 = scalar_lea.sflag [#allocation6], %s361
        %s363 = sand.u32 %s63, 1
        %s364 = smul.addr %s363, 16
        %s365 = scalar_lea.vmem [#allocation5], %s364
        // Predicated region
        $region57: #{tpu_custom_call.1} parent=51 // pred_check
          %p366 = pneg %p76
        $region58: #{tpu_custom_call.1} parent=51 // pred_check_branch
          %368 = sbr.rel (%p366) target = $region60
        $region59: #{tpu_custom_call.1} parent=51 // pred_region
          %370 = dma.done %s362, 256
        $region60: #{tpu_custom_call.1} parent=51 // pred_fallthru
          _
        %s371 = sand.u32 %s29, 1
        %s372 = scalar_lea.sflag [#allocation6], %s371
        %s373 = sand.u32 %s89, 1
        %s374 = smul.addr %s373, 16
        %s375 = scalar_lea.vmem [#allocation7], %s374
        // Predicated region
        $region61: #{tpu_custom_call.1} parent=51 // pred_check
          %p376 = pneg %p102
        $region62: #{tpu_custom_call.1} parent=51 // pred_check_branch
          %378 = sbr.rel (%p376) target = $region64
        $region63: #{tpu_custom_call.1} parent=51 // pred_region
          %380 = dma.done %s372, 256
        $region64: #{tpu_custom_call.1} parent=51 // pred_fallthru
          _
        // Predicated region
        $region65: #{tpu_custom_call.1} parent=51 // pred_check
          %p381 = pneg %p123
        $region66: #{tpu_custom_call.1} parent=51 // pred_check_branch
          %383 = sbr.rel (%p381) target = $region68
        $region67: #{tpu_custom_call.1} parent=51 // pred_region
          %385 = dma.done [#allocation9], 768
        $region68: #{tpu_custom_call.1} parent=51 // pred_fallthru
          _
        %s386 = sand.u32 %s37, 1
        %s387 = scalar_lea.sflag [#allocation3], %s386
        %s388 = sand.u32 %s37, 1
        %s389 = smul.addr %s388, 16
        %s390 = scalar_lea.vmem [#allocation2], %s389
        %p391 = pneg %p50
        %p392 = pneg %p47
        %s393 = sand.u32 %s29, 1
        %s394 = scalar_lea.sflag [#allocation6], %s393
        %s395 = sand.u32 %s63, 1
        %s396 = smul.addr %s395, 16
        %s397 = scalar_lea.vmem [#allocation5], %s396
        %p398 = pneg %p76
        %p399 = pneg %p73
        %s400 = sand.u32 %s29, 1
        %s401 = scalar_lea.sflag [#allocation6], %s400
        %s402 = sand.u32 %s89, 1
        %s403 = smul.addr %s402, 16
        %s404 = scalar_lea.vmem [#allocation7], %s403
        %p405 = pneg %p102
        %p406 = pneg %p99
        %p407 = pneg %p123
        %p408 = pneg %p120
        %p409 = pneg %p144
        %p410 = pneg %p141
        %p411 = pneg %p165
        %p412 = pneg %p162
        %p413 = pneg %p186
        %p414 = pneg %p183
        %p415 = pneg %p207
        %p416 = pneg %p204
        %p417 = pneg %p233
        %p418 = pneg %p230
        %s419 = sand.u32 %s220, 1
        %s420 = scalar_lea.sflag [#allocation4], %s419
        %s421 = sand.u32 %s220, 1
        %s422 = smul.addr %s421, 8
        %s423 = scalar_lea.vmem [#allocation10], %s422
        %v425 = vld [vmem:[%s355] sm:$0xff]
        %v426 = vld [vmem:[%s355 + $0x8] sm:$0xff]
        %v427 = vpack.c.bf16 %v426, %v425
        %v428 = vld [vmem:[%s365] sm:$0xff]
        %v429 = vld [vmem:[%s365 + $0x8] sm:$0xff]
        %v430 = vpack.c.bf16 %v429, %v428
        %v431 = vld [vmem:[%s375] sm:$0xff]
        %v432 = vld [vmem:[%s375 + $0x8] sm:$0xff]
        %v433 = vpack.c.bf16 %v432, %v431
        %v434 = vld [vmem:[#allocation8] sm:$0xf]
        %v435 = vld [vmem:[#allocation8 + $0x4] sm:$0xf]
        %v436 = vld [vmem:[#allocation8 + $0x8] sm:$0xf]
        %v437 = vld [vmem:[#allocation8 + $0xc] sm:$0xf]
        %v438 = vld [vmem:[%s5] sm:$0x1]
        %v439 = vperm.slane %v438, 0
        %v444 = vunpack.c.l.b16 %v434
        %v445 = vunpack.c.l.b16 %v435
        %v446 = vunpack.c.l.b16 %v436
        %v447 = vunpack.c.l.b16 %v437
        %v448 = vpack.c.b16 %v445, %v444
        %v449 = vpack.c.b16 %v447, %v446
        %vm452 = vcmask 261120
        %v454 = vsel %vm452, %v427, 0
        %456 = vmatpush.bf16.msra.mxu0 0
        %457 = vmatpush.bf16.msra.mxu0 0
        %458 = vmatpush.bf16.msra.mxu0 0
        %459 = vmatpush.bf16.msra.mxu0 0
        %460 = vmatpush.bf16.msra.mxu0 0
        %461 = vmatpush.bf16.msra.mxu0 0
        %462 = vmatpush.bf16.msra.mxu0 %v449
        %463 = vmatpush.bf16.msra.mxu0 %v448
        %464 = vmatmul.bf16.gmra.mxu0 %v454
        %v465 = vpop.f32.mrf.mxu0
        %v466 = vadd.f32 %v439, %v465
        %v467 = vpop.f32.mrf.mxu0
        %v468 = vadd.f32 %v439, %v467
        %469 = vdwg.mxu0
        %s470 = scalar_lea.vmem [#allocation8], 16
        %v471 = vld [vmem:[%s470] sm:$0xf]
        %v472 = vld [vmem:[%s470 + $0x4] sm:$0xf]
        %v473 = vld [vmem:[%s470 + $0x8] sm:$0xf]
        %v474 = vld [vmem:[%s470 + $0xc] sm:$0xf]
        %v475 = vld [vmem:[%s5 + $0x1] sm:$0x1]
        %v476 = vperm.slane %v475, 0
        %v481 = vunpack.c.l.b16 %v471
        %v482 = vunpack.c.l.b16 %v472
        %v483 = vunpack.c.l.b16 %v473
        %v484 = vunpack.c.l.b16 %v474
        %v485 = vpack.c.b16 %v482, %v481
        %v486 = vpack.c.b16 %v484, %v483
        %v490 = vsel %vm452, %v430, 0
        %492 = vmatpush.bf16.msra.mxu0 0
        %493 = vmatpush.bf16.msra.mxu0 0
        %494 = vmatpush.bf16.msra.mxu0 0
        %495 = vmatpush.bf16.msra.mxu0 0
        %496 = vmatpush.bf16.msra.mxu0 0
        %497 = vmatpush.bf16.msra.mxu0 0
        %498 = vmatpush.bf16.msra.mxu0 %v486
        %499 = vmatpush.bf16.msra.mxu0 %v485
        %500 = vmatmul.bf16.gmra.mxu0 %v490
        %v501 = vpop.f32.mrf.mxu0
        %v502 = vadd.f32 %v476, %v501
        %v503 = vpop.f32.mrf.mxu0
        %v504 = vadd.f32 %v476, %v503
        %505 = vdwg.mxu0
        %s506 = scalar_lea.vmem [#allocation8], 32
        %v507 = vld [vmem:[%s506] sm:$0xf]
        %v508 = vld [vmem:[%s506 + $0x4] sm:$0xf]
        %v509 = vld [vmem:[%s506 + $0x8] sm:$0xf]
        %v510 = vld [vmem:[%s506 + $0xc] sm:$0xf]
        %v511 = vld [vmem:[%s5 + $0x2] sm:$0x1]
        %v512 = vperm.slane %v511, 0
        %v517 = vunpack.c.l.b16 %v507
        %v518 = vunpack.c.l.b16 %v508
        %v519 = vunpack.c.l.b16 %v509
        %v520 = vunpack.c.l.b16 %v510
        %v521 = vpack.c.b16 %v518, %v517
        %v522 = vpack.c.b16 %v520, %v519
        %v526 = vsel %vm452, %v433, 0
        %528 = vmatpush.bf16.msra.mxu0 0
        %529 = vmatpush.bf16.msra.mxu0 0
        %530 = vmatpush.bf16.msra.mxu0 0
        %531 = vmatpush.bf16.msra.mxu0 0
        %532 = vmatpush.bf16.msra.mxu0 0
        %533 = vmatpush.bf16.msra.mxu0 0
        %534 = vmatpush.bf16.msra.mxu0 %v522
        %535 = vmatpush.bf16.msra.mxu0 %v521
        %536 = vmatmul.bf16.gmra.mxu0 %v526
        %v537 = vpop.f32.mrf.mxu0
        %v538 = vadd.f32 %v512, %v537
        %v539 = vpop.f32.mrf.mxu0
        %v540 = vadd.f32 %v512, %v539
        %541 = vdwg.mxu0
        %v542 = vld [vmem:[%s5 + $0x3] sm:$0x1]
        %v543 = vpack.c.bf16 %v466, %v466
        %v544 = vpack.c.bf16 %v468, %v468
        %v545 = vpack.c.bf16 %v504, %v502
        %v546 = vpack.c.bf16 %v540, %v538
        %v547 = vld [vmem:[%s6] sm:$0xf]
        %v548 = vld [vmem:[%s6 + $0x4] sm:$0xf]
        %v549 = vld [vmem:[%s7] sm:$0xf]
        %v550 = vld [vmem:[%s7 + $0x4] sm:$0xf]
        %551 = vxpose.xlu0.c.b16.start [1/8] %v545, 128
        %552 = vxpose.xlu0.c.b16.cont [2/8] 0, 128
        %553 = vxpose.xlu0.c.b16.cont [3/8] 0, 128
        %554 = vxpose.xlu0.c.b16.cont [4/8] 0, 128
        %555 = vxpose.xlu0.c.b16.cont [5/8] 0, 128
        %556 = vxpose.xlu0.c.b16.cont [6/8] 0, 128
        %557 = vxpose.xlu0.c.b16.cont [7/8] 0, 128
        %558 = vxpose.xlu0.c.b16.end [8/8] 0, 128
        %v559 = vpop.trf.xlu0
        %v560 = vpop.trf.xlu0
        %v561 = vpop.trf.xlu0
        %v562 = vpop.trf.xlu0
        %v563 = vpop.trf.xlu0
        %v564 = vpop.trf.xlu0
        %v565 = vpop.trf.xlu0
        %v566 = vpop.trf.xlu0
        %v569 = vunpack.c.l.b16 %v547
        %v570 = vunpack.c.l.b16 %v548
        %v571 = vpack.c.b16 %v570, %v569
        %vm573 = vcmask 130048
        %v575 = vsel %vm573, %v559, 0
        %v578 = vsel %vm573, %v560, 0
        %580 = vmatpush.bf16.msra.mxu0 0
        %581 = vmatpush.bf16.msra.mxu0 0
        %582 = vmatpush.bf16.msra.mxu0 0
        %583 = vmatpush.bf16.msra.mxu0 0
        %584 = vmatpush.bf16.msra.mxu0 0
        %585 = vmatpush.bf16.msra.mxu0 0
        %586 = vmatpush.bf16.msra.mxu0 0
        %587 = vmatpush.bf16.msra.mxu0 %v571
        %588 = vmatmul.bf16.gmra.mxu0 %v575
        %v589 = vpop.f32.mrf.mxu0
        %v590 = vadd.f32 0.0, %v589
        %v591 = vpop.f32.mrf.mxu0
        %v592 = vadd.f32 0.0, %v591
        %593 = vmatmul.bf16.gmra.mxu0 %v578
        %v594 = vpop.f32.mrf.mxu0
        %v595 = vadd.f32 0.0, %v594
        %v596 = vpop.f32.mrf.mxu0
        %v597 = vadd.f32 0.0, %v596
        %598 = vdwg.mxu0
        %v599 = vpack.c.bf16 %v590, %v590
        %v600 = vpack.c.bf16 %v592, %v592
        %v601 = vpack.c.bf16 %v595, %v595
        %v602 = vpack.c.bf16 %v597, %v597
        %v605 = vunpack.c.l.b16 %v549
        %v606 = vunpack.c.l.b16 %v550
        %v607 = vpack.c.b16 %v606, %v605
        %609 = vxpose.xlu0.c.b16.start [1/8] %v607, 128
        %610 = vxpose.xlu0.c.b16.cont [2/8] 0, 128
        %611 = vxpose.xlu0.c.b16.cont [3/8] 0, 128
        %612 = vxpose.xlu0.c.b16.cont [4/8] 0, 128
        %613 = vxpose.xlu0.c.b16.cont [5/8] 0, 128
        %614 = vxpose.xlu0.c.b16.cont [6/8] 0, 128
        %615 = vxpose.xlu0.c.b16.cont [7/8] 0, 128
        %616 = vxpose.xlu0.c.b16.end [8/8] 0, 128
        %v617 = vpop.trf.xlu0
        %v618 = vpop.trf.xlu0
        %v619 = vpop.trf.xlu0
        %v620 = vpop.trf.xlu0
        %v621 = vpop.trf.xlu0
        %v622 = vpop.trf.xlu0
        %v623 = vpop.trf.xlu0
        %v624 = vpop.trf.xlu0
        %v626 = vsel %vm573, %v617, 0
        %628 = vmatpush.bf16.msra.mxu0 0
        %629 = vmatpush.bf16.msra.mxu0 0
        %630 = vmatpush.bf16.msra.mxu0 0
        %631 = vmatpush.bf16.msra.mxu0 0
        %632 = vmatpush.bf16.msra.mxu0 0
        %633 = vmatpush.bf16.msra.mxu0 0
        %634 = vmatpush.bf16.msra.mxu0 0
        %635 = vmatpush.bf16.msra.mxu0 %v546
        %636 = vmatmul.bf16.gmra.mxu0 %v626
        %v637 = vpop.f32.mrf.mxu0
        %v638 = vadd.f32 0.0, %v637
        %v639 = vpop.f32.mrf.mxu0
        %640 = vdwg.mxu0
        %v641 = vpack.c.bf16 %v638, %v638
        %v644 = vunpack.c.l.b16 %v543
        %v645 = vunpack.c.l.b16 %v544
        %v646 = vpack.c.b16 %v645, %v644
        %vm647 = vcmask 64512
        %v649 = vsel %vm647, %v646, 0
        %vm651 = vcmask 1043456
        %v653 = vsel %vm651, %v599, 0
        %655 = vmatpush.bf16.msra.mxu0 0
        %656 = vmatpush.bf16.msra.mxu0 0
        %657 = vmatpush.bf16.msra.mxu0 0
        %658 = vmatpush.bf16.msra.mxu0 0
        %659 = vmatpush.bf16.msra.mxu0 0
        %660 = vmatpush.bf16.msra.mxu0 0
        %661 = vmatpush.bf16.msra.mxu0 0
        %662 = vmatpush.bf16.msra.mxu0 %v653
        %663 = vmatmul.bf16.gmra.mxu0 %v649
        %v664 = vpop.f32.mrf.mxu0
        %v665 = vadd.f32 0.0, %v664
        %v666 = vpop.f32.mrf.mxu0
        %v667 = vadd.f32 0.0, %v666
        %668 = vdwg.mxu0
        %v669 = vsel %vm647, %v665, -inf
        %670 = vmax.xlane.f32.xlu0 %v669
        %v671 = vpop.xlane.xlu0 %670
        %v672 = vsel %vm647, %v667, -inf
        %673 = vmax.xlane.f32.xlu0 %v672
        %v674 = vpop.xlane.xlu0 %673
        %v675 = vsub.f32 %v665, %v671
        %v676 = vsub.f32 %v667, %v674
        %v677 = vmul.f32 %v675, 1.442695
        %v678 = vpow.pop %v677
        %v679 = vmul.f32 %v676, 1.442695
        %v680 = vpow.pop %v679
        %v681 = vsel %vm647, %v678, 0.0
        %682 = vadd.xlane.f32.xlu0 %v681
        %v683 = vpop.xlane.xlu0 %682
        %v684 = vsel %vm647, %v680, 0.0
        %685 = vadd.xlane.f32.xlu0 %v684
        %v686 = vpop.xlane.xlu0 %685
        %v687 = vrcp.pop %v683
        %v688 = vrcp.pop %v686
        %v689 = vmul.f32 %v678, %v687
        %v690 = vmul.f32 %v680, %v688
        %v691 = vpack.c.bf16 %v690, %v689
        %v693 = vsel %vm647, %v691, 0
        %v696 = vsel %vm651, %v641, 0
        %698 = vmatpush.bf16.msra.mxu0 0
        %699 = vmatpush.bf16.msra.mxu0 0
        %700 = vmatpush.bf16.msra.mxu0 0
        %701 = vmatpush.bf16.msra.mxu0 0
        %702 = vmatpush.bf16.msra.mxu0 0
        %703 = vmatpush.bf16.msra.mxu0 0
        %704 = vmatpush.bf16.msra.mxu0 0
        %705 = vmatpush.bf16.msra.mxu0 %v696
        %706 = vmatmul.bf16.gmra.mxu0 %v693
        %v707 = vpop.f32.mrf.mxu0
        %v708 = vadd.f32 0.0, %v707
        %v709 = vpop.f32.mrf.mxu0
        %v710 = vadd.f32 0.0, %v709
        %711 = vdwg.mxu0
        %v712 = vpack.c.bf16 %v710, %v708
        %v713 = vld [vmem:[%s4] sm:$0xf]
        %714 = vrot.lane.b32.xlu0 %v646, 120
        %v715 = vpop.permute.xlu0 %714
        %v717 = vsel %vm647, %v715, 0
        %v720 = vsel %vm651, %v600, 0
        %722 = vmatpush.bf16.msra.mxu0 0
        %723 = vmatpush.bf16.msra.mxu0 0
        %724 = vmatpush.bf16.msra.mxu0 0
        %725 = vmatpush.bf16.msra.mxu0 0
        %726 = vmatpush.bf16.msra.mxu0 0
        %727 = vmatpush.bf16.msra.mxu0 0
        %728 = vmatpush.bf16.msra.mxu0 0
        %729 = vmatpush.bf16.msra.mxu0 %v720
        %730 = vmatmul.bf16.gmra.mxu0 %v717
        %v731 = vpop.f32.mrf.mxu0
        %v732 = vadd.f32 0.0, %v731
        %v733 = vpop.f32.mrf.mxu0
        %v734 = vadd.f32 0.0, %v733
        %735 = vdwg.mxu0
        %v736 = vsel %vm647, %v732, -inf
        %737 = vmax.xlane.f32.xlu0 %v736
        %v738 = vpop.xlane.xlu0 %737
        %v739 = vsel %vm647, %v734, -inf
        %740 = vmax.xlane.f32.xlu0 %v739
        %v741 = vpop.xlane.xlu0 %740
        %v742 = vsub.f32 %v732, %v738
        %v743 = vsub.f32 %v734, %v741
        %v744 = vmul.f32 %v742, 1.442695
        %v745 = vpow.pop %v744
        %v746 = vmul.f32 %v743, 1.442695
        %v747 = vpow.pop %v746
        %v748 = vsel %vm647, %v745, 0.0
        %749 = vadd.xlane.f32.xlu0 %v748
        %v750 = vpop.xlane.xlu0 %749
        %v751 = vsel %vm647, %v747, 0.0
        %752 = vadd.xlane.f32.xlu0 %v751
        %v753 = vpop.xlane.xlu0 %752
        %v754 = vrcp.pop %v750
        %v755 = vrcp.pop %v753
        %v756 = vmul.f32 %v745, %v754
        %v757 = vmul.f32 %v747, %v755
        %v758 = vpack.c.bf16 %v757, %v756
        %v760 = vunpack.c.l.b16 %v641
        %v761 = vpack.c.b16 %v760, %v760
        %762 = vrot.lane.b32.xlu0 %v761, 120
        %v763 = vpop.permute.xlu0 %762
        %v765 = vsel %vm647, %v758, 0
        %v768 = vsel %vm651, %v763, 0
        %770 = vmatpush.bf16.msra.mxu0 0
        %771 = vmatpush.bf16.msra.mxu0 0
        %772 = vmatpush.bf16.msra.mxu0 0
        %773 = vmatpush.bf16.msra.mxu0 0
        %774 = vmatpush.bf16.msra.mxu0 0
        %775 = vmatpush.bf16.msra.mxu0 0
        %776 = vmatpush.bf16.msra.mxu0 0
        %777 = vmatpush.bf16.msra.mxu0 %v768
        %778 = vmatmul.bf16.gmra.mxu0 %v765
        %v779 = vpop.f32.mrf.mxu0
        %v780 = vadd.f32 0.0, %v779
        %v781 = vpop.f32.mrf.mxu0
        %v782 = vadd.f32 0.0, %v781
        %783 = vdwg.mxu0
        %v784 = vpack.c.bf16 %v782, %v780
        %s785 = scalar_lea.vmem %s4, 4
        %v786 = vld [vmem:[%s785] sm:$0xf]
        %v788 = vsel %vm647, %v784, 0
        %v791 = vsel %vm651, %v786, 0
        %793 = vmatpush.bf16.msra.mxu0 0
        %794 = vmatpush.bf16.msra.mxu0 0
        %795 = vmatpush.bf16.msra.mxu0 0
        %796 = vmatpush.bf16.msra.mxu0 0
        %797 = vmatpush.bf16.msra.mxu0 0
        %798 = vmatpush.bf16.msra.mxu0 0
        %799 = vmatpush.bf16.msra.mxu0 0
        %800 = vmatpush.bf16.msra.mxu0 %v791
        %801 = vmatmul.bf16.gmra.mxu0 %v788
        %v802 = vpop.f32.mrf.mxu0
        %v803 = vadd.f32 0.0, %v802
        %v804 = vpop.f32.mrf.mxu0
        %v805 = vadd.f32 0.0, %v804
        %806 = vdwg.mxu0
        %v808 = vsel %vm647, %v712, 0
        %v811 = vsel %vm651, %v713, 0
        %813 = vmatpush.bf16.msra.mxu0 0
        %814 = vmatpush.bf16.msra.mxu0 0
        %815 = vmatpush.bf16.msra.mxu0 0
        %816 = vmatpush.bf16.msra.mxu0 0
        %817 = vmatpush.bf16.msra.mxu0 0
        %818 = vmatpush.bf16.msra.mxu0 0
        %819 = vmatpush.bf16.msra.mxu0 0
        %820 = vmatpush.bf16.msra.mxu0 %v811
        %821 = vmatmul.bf16.gmra.mxu0 %v808
        %v822 = vpop.f32.mrf.mxu0
        %v823 = vadd.f32 %v803, %v822
        %v824 = vpop.f32.mrf.mxu0
        %v825 = vadd.f32 %v805, %v824
        %826 = vdwg.mxu0
        %827 = vrot.lane.b32.xlu0 %v646, 112
        %v828 = vpop.permute.xlu0 %827
        %v830 = vsel %vm647, %v828, 0
        %v833 = vsel %vm651, %v601, 0
        %835 = vmatpush.bf16.msra.mxu0 0
        %836 = vmatpush.bf16.msra.mxu0 0
        %837 = vmatpush.bf16.msra.mxu0 0
        %838 = vmatpush.bf16.msra.mxu0 0
        %839 = vmatpush.bf16.msra.mxu0 0
        %840 = vmatpush.bf16.msra.mxu0 0
        %841 = vmatpush.bf16.msra.mxu0 0
        %842 = vmatpush.bf16.msra.mxu0 %v833
        %843 = vmatmul.bf16.gmra.mxu0 %v830
        %v844 = vpop.f32.mrf.mxu0
        %v845 = vadd.f32 0.0, %v844
        %v846 = vpop.f32.mrf.mxu0
        %v847 = vadd.f32 0.0, %v846
        %848 = vdwg.mxu0
        %v849 = vsel %vm647, %v845, -inf
        %850 = vmax.xlane.f32.xlu0 %v849
        %v851 = vpop.xlane.xlu0 %850
        %v852 = vsel %vm647, %v847, -inf
        %853 = vmax.xlane.f32.xlu0 %v852
        %v854 = vpop.xlane.xlu0 %853
        %v855 = vsub.f32 %v845, %v851
        %v856 = vsub.f32 %v847, %v854
        %v857 = vmul.f32 %v855, 1.442695
        %v858 = vpow.pop %v857
        %v859 = vmul.f32 %v856, 1.442695
        %v860 = vpow.pop %v859
        %v861 = vsel %vm647, %v858, 0.0
        %862 = vadd.xlane.f32.xlu0 %v861
        %v863 = vpop.xlane.xlu0 %862
        %v864 = vsel %vm647, %v860, 0.0
        %865 = vadd.xlane.f32.xlu0 %v864
        %v866 = vpop.xlane.xlu0 %865
        %v867 = vrcp.pop %v863
        %v868 = vrcp.pop %v866
        %v869 = vmul.f32 %v858, %v867
        %v870 = vmul.f32 %v860, %v868
        %v871 = vpack.c.bf16 %v870, %v869
        %872 = vrot.lane.b32.xlu0 %v761, 112
        %v873 = vpop.permute.xlu0 %872
        %v875 = vsel %vm647, %v871, 0
        %v878 = vsel %vm651, %v873, 0
        %880 = vmatpush.bf16.msra.mxu0 0
        %881 = vmatpush.bf16.msra.mxu0 0
        %882 = vmatpush.bf16.msra.mxu0 0
        %883 = vmatpush.bf16.msra.mxu0 0
        %884 = vmatpush.bf16.msra.mxu0 0
        %885 = vmatpush.bf16.msra.mxu0 0
        %886 = vmatpush.bf16.msra.mxu0 0
        %887 = vmatpush.bf16.msra.mxu0 %v878
        %888 = vmatmul.bf16.gmra.mxu0 %v875
        %v889 = vpop.f32.mrf.mxu0
        %v890 = vadd.f32 0.0, %v889
        %v891 = vpop.f32.mrf.mxu0
        %v892 = vadd.f32 0.0, %v891
        %893 = vdwg.mxu0
        %v894 = vpack.c.bf16 %v892, %v890
        %s895 = scalar_lea.vmem %s4, 8
        %v896 = vld [vmem:[%s895] sm:$0xf]
        %v898 = vsel %vm647, %v894, 0
        %v901 = vsel %vm651, %v896, 0
        %903 = vmatpush.bf16.msra.mxu0 0
        %904 = vmatpush.bf16.msra.mxu0 0
        %905 = vmatpush.bf16.msra.mxu0 0
        %906 = vmatpush.bf16.msra.mxu0 0
        %907 = vmatpush.bf16.msra.mxu0 0
        %908 = vmatpush.bf16.msra.mxu0 0
        %909 = vmatpush.bf16.msra.mxu0 0
        %910 = vmatpush.bf16.msra.mxu0 %v901
        %911 = vmatmul.bf16.gmra.mxu0 %v898
        %v912 = vpop.f32.mrf.mxu0
        %v913 = vadd.f32 0.0, %v912
        %v914 = vpop.f32.mrf.mxu0
        %v915 = vadd.f32 0.0, %v914
        %916 = vdwg.mxu0
        %v917 = vadd.f32 %v823, %v913
        %v918 = vadd.f32 %v825, %v915
        %919 = vrot.lane.b32.xlu0 %v646, 104
        %v920 = vpop.permute.xlu0 %919
        %v922 = vsel %vm647, %v920, 0
        %v925 = vsel %vm651, %v602, 0
        %927 = vmatpush.bf16.msra.mxu0 0
        %928 = vmatpush.bf16.msra.mxu0 0
        %929 = vmatpush.bf16.msra.mxu0 0
        %930 = vmatpush.bf16.msra.mxu0 0
        %931 = vmatpush.bf16.msra.mxu0 0
        %932 = vmatpush.bf16.msra.mxu0 0
        %933 = vmatpush.bf16.msra.mxu0 0
        %934 = vmatpush.bf16.msra.mxu0 %v925
        %935 = vmatmul.bf16.gmra.mxu0 %v922
        %v936 = vpop.f32.mrf.mxu0
        %v937 = vadd.f32 0.0, %v936
        %v938 = vpop.f32.mrf.mxu0
        %v939 = vadd.f32 0.0, %v938
        %940 = vdwg.mxu0
        %v941 = vsel %vm647, %v937, -inf
        %942 = vmax.xlane.f32.xlu0 %v941
        %v943 = vpop.xlane.xlu0 %942
        %v944 = vsel %vm647, %v939, -inf
        %945 = vmax.xlane.f32.xlu0 %v944
        %v946 = vpop.xlane.xlu0 %945
        %v947 = vsub.f32 %v937, %v943
        %v948 = vsub.f32 %v939, %v946
        %v949 = vmul.f32 %v947, 1.442695
        %v950 = vpow.pop %v949
        %v951 = vmul.f32 %v948, 1.442695
        %v952 = vpow.pop %v951
        %v953 = vsel %vm647, %v950, 0.0
        %954 = vadd.xlane.f32.xlu0 %v953
        %v955 = vpop.xlane.xlu0 %954
        %v956 = vsel %vm647, %v952, 0.0
        %957 = vadd.xlane.f32.xlu0 %v956
        %v958 = vpop.xlane.xlu0 %957
        %v959 = vrcp.pop %v955
        %v960 = vrcp.pop %v958
        %v961 = vmul.f32 %v950, %v959
        %v962 = vmul.f32 %v952, %v960
        %v963 = vpack.c.bf16 %v962, %v961
        %964 = vrot.lane.b32.xlu0 %v761, 104
        %v965 = vpop.permute.xlu0 %964
        %v967 = vsel %vm647, %v963, 0
        %v970 = vsel %vm651, %v965, 0
        %972 = vmatpush.bf16.msra.mxu0 0
        %973 = vmatpush.bf16.msra.mxu0 0
        %974 = vmatpush.bf16.msra.mxu0 0
        %975 = vmatpush.bf16.msra.mxu0 0
        %976 = vmatpush.bf16.msra.mxu0 0
        %977 = vmatpush.bf16.msra.mxu0 0
        %978 = vmatpush.bf16.msra.mxu0 0
        %979 = vmatpush.bf16.msra.mxu0 %v970
        %980 = vmatmul.bf16.gmra.mxu0 %v967
        %v981 = vpop.f32.mrf.mxu0
        %v982 = vadd.f32 0.0, %v981
        %v983 = vpop.f32.mrf.mxu0
        %v984 = vadd.f32 0.0, %v983
        %985 = vdwg.mxu0
        %v986 = vpack.c.bf16 %v984, %v982
        %s987 = scalar_lea.vmem %s4, 12
        %v988 = vld [vmem:[%s987] sm:$0xf]
        %v990 = vsel %vm647, %v986, 0
        %v993 = vsel %vm651, %v988, 0
        %995 = vmatpush.bf16.msra.mxu0 0
        %996 = vmatpush.bf16.msra.mxu0 0
        %997 = vmatpush.bf16.msra.mxu0 0
        %998 = vmatpush.bf16.msra.mxu0 0
        %999 = vmatpush.bf16.msra.mxu0 0
        %1000 = vmatpush.bf16.msra.mxu0 0
        %1001 = vmatpush.bf16.msra.mxu0 0
        %1002 = vmatpush.bf16.msra.mxu0 %v993
        %1003 = vmatmul.bf16.gmra.mxu0 %v990
        %v1004 = vpop.f32.mrf.mxu0
        %v1005 = vadd.f32 0.0, %v1004
        %v1006 = vpop.f32.mrf.mxu0
        %v1007 = vadd.f32 0.0, %v1006
        %1008 = vdwg.mxu0
        %v1009 = vadd.f32 %v917, %v1005
        %v1010 = vadd.f32 %v918, %v1007
        %v1011 = vperm.slane %v542, 0
        %v1012 = vadd.f32 %v1009, %v1011
        %v1013 = vadd.f32 %v1010, %v1011
        %v1014 = vpack.c.bf16 %v1012, %v1012
        %v1015 = vpack.c.bf16 %v1013, %v1013
        %vm1016 = vcmask 257024
        %1017 = vst.msk [vmem:[%s423] sm:$0xf] %vm1016, %v1014
        %1018 = vst.msk [vmem:[%s423 + $0x4] sm:$0xf] %vm1016, %v1015
        %s1019 = sand.u32 %s220, 1
        %s1020 = scalar_lea.sflag [#allocation4], %s1019
        %s1021 = sand.u32 %s220, 1
        %s1022 = smul.addr %s1021, 8
        %s1023 = scalar_lea.vmem [#allocation10], %s1022
        // Predicated region
        $region69: #{tpu_custom_call.1} parent=51 // pred_check
          %p1024 = pneg %p230
        $region70: #{tpu_custom_call.1} parent=51 // pred_check_branch
          %1026 = sbr.rel (%p1024) target = $region72
        $region71: #{tpu_custom_call.1} parent=51 // pred_region
          %1028 = vsyncadd %s1020, 0
          %s1029 = smul.addr %s29, 2
          %s1030 = smul.addr %s1029, 4
          %s1031 = scalar_lea.hbm %s8, %s1030
          %s1032 = sshll.u32 %s1023, 4
          %s1033 = int_to_ptr.vmem [resolvable:$true] %s1032
          %s1034 = sshll.u32 %s1031, 4
          %s1035 = int_to_ptr.hbm [resolvable:$true] %s1034
          %1040 = dma.vmem_to_hbm [thread:$0]  %s1033, 128, %s1035, %s1020, 64, 64, 4
        $region72: #{tpu_custom_call.1} parent=51 // pred_fallthru
          _
      $region52: #{tpu_custom_call.1} parent=5 // pred_fallthru
        _
      %p1041 = scmp.le.s32.totalorder 2, %s24
      // Predicated region
      $region73: #{tpu_custom_call.1} parent=5 // pred_check
        %p1042 = pneg %p1041
      $region74: #{tpu_custom_call.1} parent=5 // pred_check_branch
        %1044 = sbr.rel (%p1042) target = $region76
      $region75: #{tpu_custom_call.1} parent=5 // pred_region
        %s1045 = ssub.s32 %s24, 2
        // Predicated region
        $region77: #{tpu_custom_call.1} parent=75 // pred_check
          %p1046 = pneg %p236
        $region78: #{tpu_custom_call.1} parent=75 // pred_check_branch
          %1048 = sbr.rel (%p1046) target = $region80
        $region79: #{tpu_custom_call.1} parent=75 // pred_region
          %s1049 = sand.u32 %s221, 1
          %s1050 = scalar_lea.sflag [#allocation4], %s1049
          %s1051 = sand.u32 %s221, 1
          %s1052 = smul.addr %s1051, 8
          %s1053 = scalar_lea.vmem [#allocation10], %s1052
          %1055 = dma.done %s1050, 128
        $region80: #{tpu_custom_call.1} parent=75 // pred_fallthru
          _
      $region76: #{tpu_custom_call.1} parent=5 // pred_fallthru
        _
    $region6: #{tpu_custom_call.1} parent=1 // loop_footer
      %s28 = sadd.s32 1, %s24
    $region7: #{tpu_custom_call.1} parent=1 // loop_footer_branch
      %23 = sbr.rel target = $region3
    $region8: #{tpu_custom_call.1} parent=1 // loop_exit
      _
    %1056 = vsyncpa [#allocation3], 1
    %s1057 = scalar_lea.sflag [#allocation3], 1
    %1058 = vsyncpa %s1057, 1
    %1059 = vsyncpa [#allocation6], 1
    %s1060 = scalar_lea.sflag [#allocation6], 1
    %1061 = vsyncpa %s1060, 1
    %1062 = vsyncpa [#allocation9], 1
    %1063 = vsyncpa [#allocation4], 1
    %s1064 = scalar_lea.sflag [#allocation4], 1
    %1065 = vsyncpa %s1064, 1

// kernel: tpu_custom_call.1
$region0: #{tpu_custom_call.1}
  #allocation0 [shape = 'u32[]', space=smem, size = 0x4, offset = 0x4, fixed_abs, tag = 'smem constant byte address 0x4 - core index']
  #allocation1 [shape = 'u32[72,128]{1,0:T(1,128)}', space=vmem, size = 0x9000, scoped, tag = 'internal scratch']
  %s0 = inlined_call_operand.hbm [shape: f32[2,16,32], index: 0, kind: input, shape index: {}]
  %s1 = inlined_call_operand.hbm [shape: f32[2,16,32], index: 1, kind: input, shape index: {}]
  %s2 = inlined_call_operand.hbm [shape: f32[2,16,32], index: 2, kind: input, shape index: {}]
  %s3 = inlined_call_operand.hbm [shape: bf16[3,32,32], index: 3, kind: input, shape index: {}]
  %s4 = inlined_call_operand.vmem [shape: bf16[4,8,32], index: 4, kind: input, shape index: {}]
  %s5 = inlined_call_operand.vmem [shape: f32[4,32], index: 5, kind: input, shape index: {}]
  %s6 = inlined_call_operand.vmem [shape: bf16[16,8], index: 6, kind: input, shape index: {}]
  %s7 = inlined_call_operand.vmem [shape: bf16[16,8], index: 7, kind: input, shape index: {}]
  %s8 = inlined_call_operand.hbm [shape: bf16[2,16,32], index: 8, kind: output, shape index: {}]
  %s9 = sld [smem:[#allocation0]]
  $region81: #{tpu_custom_call.1} parent=0
    _
  %s11 = ssub.s32 1, %s9
  %s12 = scalar_select 0, %s11, %s9
  $region1: #{tpu_custom_call.1} parent=0
    #allocation2 [shape = 'u8[16384]{0}', space=vmem, size = 0x4000, scoped, tag = 'input window, operand 0']
    #allocation3 [shape = 's32[2]{0}', space=sflag, size = 0x8, scoped, tag = 'scoped memory for tpu_custom_call.1']
    #allocation4 [shape = 's32[2]{0}', space=sflag, size = 0x8, scoped, tag = 'scoped memory for tpu_custom_call.1']
    #allocation5 [shape = 'u8[16384]{0}', space=vmem, size = 0x4000, scoped, tag = 'input window, operand 1']
    #allocation6 [shape = 's32[2]{0}', space=sflag, size = 0x8, scoped, tag = 'scoped memory for tpu_custom_call.1']
    #allocation7 [shape = 'u8[16384]{0}', space=vmem, size = 0x4000, scoped, tag = 'input window, operand 2']
    #allocation8 [shape = 'u8[24576]{0}', space=vmem, size = 0x6000, scoped, tag = 'input window, operand 3, single buffered']
    #allocation9 [shape = 's32[1]{0}', space=sflag, size = 0x4, scoped, tag = 'scoped memory for tpu_custom_call.1']
    #allocation10 [shape = 'u8[8192]{0}', space=vmem, size = 0x2000, scoped, tag = 'output window, operand 0']
    %13 = vsyncpa [#allocation3], 0
    %s14 = scalar_lea.sflag [#allocation3], 1
    %15 = vsyncpa %s14, 0
    %16 = vsyncpa [#allocation6], 0
    %s17 = scalar_lea.sflag [#allocation6], 1
    %18 = vsyncpa %s17, 0
    %19 = vsyncpa [#allocation9], 0
    %20 = vsyncpa [#allocation4], 0
    %s21 = scalar_lea.sflag [#allocation4], 1
    %22 = vsyncpa %s21, 0
    loop: start=0, step=1, limit=4
    $region2: #{tpu_custom_call.1} parent=1 // loop_pre_header
      _
    $region3: #{tpu_custom_call.1} parent=1 // loop_header
      %s24 = sphi 0, %s28
      %p25 = scmp.ge.s32.totalorder %s24, 4
      %s34 = sphi 0, %s36
      %s37 = sphi 0, %s34
      %s38 = sphi 0, %s37
      %s54 = sphi 0, %s38
      %s60 = sphi 0, %s62
      %s63 = sphi 0, %s60
      %s64 = sphi 0, %s63
      %s80 = sphi 0, %s64
      %s86 = sphi 0, %s88
      %s89 = sphi 0, %s86
      %s90 = sphi 0, %s89
      %s106 = sphi 0, %s90
      %s110 = sphi 0, %s110
      %s112 = sphi 0, %s110
      %s113 = sphi 0, %s112
      %s127 = sphi 0, %s113
      %s131 = sphi 0, %s131
      %s133 = sphi 0, %s131
      %s134 = sphi 0, %s133
      %s148 = sphi 0, %s134
      %s152 = sphi 0, %s152
      %s154 = sphi 0, %s152
      %s155 = sphi 0, %s154
      %s169 = sphi 0, %s155
      %s173 = sphi 0, %s173
      %s175 = sphi 0, %s173
      %s176 = sphi 0, %s175
      %s190 = sphi 0, %s176
      %s194 = sphi 0, %s194
      %s196 = sphi 0, %s194
      %s197 = sphi 0, %s196
      %s211 = sphi 0, %s197
      %s217 = sphi 0, %s219
      %s220 = sphi 0, %s217
      %s221 = sphi 0, %s220
      %s237 = sphi 0, %s221
    $region4: #{tpu_custom_call.1} parent=1 // loop_header_branch
      %27 = sbr.rel (%p25) target = $region8
    $region5: #{tpu_custom_call.1} parent=1 // loop_body
      %s29 = ssub.s32 %s24, 1
      %s30 = ssub.s32 %s24, 2
      %s31 = sadd.s32 %s24, 1
      %s32 = ssub.s32 %s24, %s31
      %p33 = scmp.eq.s32.totalorder %s32, 0
      %s35 = sadd.s32 %s34, 1
      %s36 = scalar_select %p33, %s34, %s35
      %p39 = pneg %p33
      %p40 = scmp.eq.s32.totalorder %s24, 1
      %p41 = por %p39, %p40
      %p42 = scmp.ne.s32.totalorder %s34, %s37
      %p43 = scmp.eq.s32.totalorder %s24, 0
      %p44 = por %p42, %p43
      %p45 = scmp.ne.s32.totalorder %s34, %s37
      %p46 = scmp.eq.s32.totalorder %s29, 1
      %p47 = por %p45, %p46
      %p48 = scmp.ne.s32.totalorder %s37, %s38
      %p49 = scmp.eq.s32.totalorder %s29, 0
      %p50 = por %p48, %p49
      %p51 = scmp.ne.s32.totalorder %s37, %s38
      %p52 = scmp.eq.s32.totalorder %s30, 1
      %p53 = por %p51, %p52
      %p55 = scmp.ne.s32.totalorder %s38, %s54
      %p56 = scmp.eq.s32.totalorder %s30, 0
      %p57 = por %p55, %p56
      %s58 = ssub.s32 %s24, %s31
      %p59 = scmp.eq.s32.totalorder %s58, 0
      %s61 = sadd.s32 %s60, 1
      %s62 = scalar_select %p59, %s60, %s61
      %p65 = pneg %p59
      %p66 = scmp.eq.s32.totalorder %s24, 1
      %p67 = por %p65, %p66
      %p68 = scmp.ne.s32.totalorder %s60, %s63
      %p69 = scmp.eq.s32.totalorder %s24, 0
      %p70 = por %p68, %p69
      %p71 = scmp.ne.s32.totalorder %s60, %s63
      %p72 = scmp.eq.s32.totalorder %s29, 1
      %p73 = por %p71, %p72
      %p74 = scmp.ne.s32.totalorder %s63, %s64
      %p75 = scmp.eq.s32.totalorder %s29, 0
      %p76 = por %p74, %p75
      %p77 = scmp.ne.s32.totalorder %s63, %s64
      %p78 = scmp.eq.s32.totalorder %s30, 1
      %p79 = por %p77, %p78
      %p81 = scmp.ne.s32.totalorder %s64, %s80
      %p82 = scmp.eq.s32.totalorder %s30, 0
      %p83 = por %p81, %p82
      %s84 = ssub.s32 %s24, %s31
      %p85 = scmp.eq.s32.totalorder %s84, 0
      %s87 = sadd.s32 %s86, 1
      %s88 = scalar_select %p85, %s86, %s87
      %p91 = pneg %p85
      %p92 = scmp.eq.s32.totalorder %s24, 1
      %p93 = por %p91, %p92
      %p94 = scmp.ne.s32.totalorder %s86, %s89
      %p95 = scmp.eq.s32.totalorder %s24, 0
      %p96 = por %p94, %p95
      %p97 = scmp.ne.s32.totalorder %s86, %s89
      %p98 = scmp.eq.s32.totalorder %s29, 1
      %p99 = por %p97, %p98
      %p100 = scmp.ne.s32.totalorder %s89, %s90
      %p101 = scmp.eq.s32.totalorder %s29, 0
      %p102 = por %p100, %p101
      %p103 = scmp.ne.s32.totalorder %s89, %s90
      %p104 = scmp.eq.s32.totalorder %s30, 1
      %p105 = por %p103, %p104
      %p107 = scmp.ne.s32.totalorder %s90, %s106
      %p108 = scmp.eq.s32.totalorder %s30, 0
      %p109 = por %p107, %p108
      %s111 = sadd.s32 %s110, 1
      %p114 = scmp.eq.s32.totalorder %s24, 1
      %p115 = scmp.ne.s32.totalorder %s110, %s112
      %p116 = scmp.eq.s32.totalorder %s24, 0
      %p117 = por %p115, %p116
      %p118 = scmp.ne.s32.totalorder %s110, %s112
      %p119 = scmp.eq.s32.totalorder %s29, 1
      %p120 = por %p118, %p119
      %p121 = scmp.ne.s32.totalorder %s112, %s113
      %p122 = scmp.eq.s32.totalorder %s29, 0
      %p123 = por %p121, %p122
      %p124 = scmp.ne.s32.totalorder %s112, %s113
      %p125 = scmp.eq.s32.totalorder %s30, 1
      %p126 = por %p124, %p125
      %p128 = scmp.ne.s32.totalorder %s113, %s127
      %p129 = scmp.eq.s32.totalorder %s30, 0
      %p130 = por %p128, %p129
      %s132 = sadd.s32 %s131, 1
      %p135 = scmp.eq.s32.totalorder %s24, 1
      %p136 = scmp.ne.s32.totalorder %s131, %s133
      %p137 = scmp.eq.s32.totalorder %s24, 0
      %p138 = por %p136, %p137
      %p139 = scmp.ne.s32.totalorder %s131, %s133
      %p140 = scmp.eq.s32.totalorder %s29, 1
      %p141 = por %p139, %p140
      %p142 = scmp.ne.s32.totalorder %s133, %s134
      %p143 = scmp.eq.s32.totalorder %s29, 0
      %p144 = por %p142, %p143
      %p145 = scmp.ne.s32.totalorder %s133, %s134
      %p146 = scmp.eq.s32.totalorder %s30, 1
      %p147 = por %p145, %p146
      %p149 = scmp.ne.s32.totalorder %s134, %s148
      %p150 = scmp.eq.s32.totalorder %s30, 0
      %p151 = por %p149, %p150
      %s153 = sadd.s32 %s152, 1
      %p156 = scmp.eq.s32.totalorder %s24, 1
      %p157 = scmp.ne.s32.totalorder %s152, %s154
      %p158 = scmp.eq.s32.totalorder %s24, 0
      %p159 = por %p157, %p158
      %p160 = scmp.ne.s32.totalorder %s152, %s154
      %p161 = scmp.eq.s32.totalorder %s29, 1
      %p162 = por %p160, %p161
      %p163 = scmp.ne.s32.totalorder %s154, %s155
      %p164 = scmp.eq.s32.totalorder %s29, 0
      %p165 = por %p163, %p164
      %p166 = scmp.ne.s32.totalorder %s154, %s155
      %p167 = scmp.eq.s32.totalorder %s30, 1
      %p168 = por %p166, %p167
      %p170 = scmp.ne.s32.totalorder %s155, %s169
      %p171 = scmp.eq.s32.totalorder %s30, 0
      %p172 = por %p170, %p171
      %s174 = sadd.s32 %s173, 1
      %p177 = scmp.eq.s32.totalorder %s24, 1
      %p178 = scmp.ne.s32.totalorder %s173, %s175
      %p179 = scmp.eq.s32.totalorder %s24, 0
      %p180 = por %p178, %p179
      %p181 = scmp.ne.s32.totalorder %s173, %s175
      %p182 = scmp.eq.s32.totalorder %s29, 1
      %p183 = por %p181, %p182
      %p184 = scmp.ne.s32.totalorder %s175, %s176
      %p185 = scmp.eq.s32.totalorder %s29, 0
      %p186 = por %p184, %p185
      %p187 = scmp.ne.s32.totalorder %s175, %s176
      %p188 = scmp.eq.s32.totalorder %s30, 1
      %p189 = por %p187, %p188
      %p191 = scmp.ne.s32.totalorder %s176, %s190
      %p192 = scmp.eq.s32.totalorder %s30, 0
      %p193 = por %p191, %p192
      %s195 = sadd.s32 %s194, 1
      %p198 = scmp.eq.s32.totalorder %s24, 1
      %p199 = scmp.ne.s32.totalorder %s194, %s196
      %p200 = scmp.eq.s32.totalorder %s24, 0
      %p201 = por %p199, %p200
      %p202 = scmp.ne.s32.totalorder %s194, %s196
      %p203 = scmp.eq.s32.totalorder %s29, 1
      %p204 = por %p202, %p203
      %p205 = scmp.ne.s32.totalorder %s196, %s197
      %p206 = scmp.eq.s32.totalorder %s29, 0
      %p207 = por %p205, %p206
      %p208 = scmp.ne.s32.totalorder %s196, %s197
      %p209 = scmp.eq.s32.totalorder %s30, 1
      %p210 = por %p208, %p209
      %p212 = scmp.ne.s32.totalorder %s197, %s211
      %p213 = scmp.eq.s32.totalorder %s30, 0
      %p214 = por %p212, %p213
      %s215 = ssub.s32 %s24, %s31
      %p216 = scmp.eq.s32.totalorder %s215, 0
      %s218 = sadd.s32 %s217, 1
      %s219 = scalar_select %p216, %s217, %s218
      %p222 = pneg %p216
      %p223 = scmp.eq.s32.totalorder %s24, 1
      %p224 = por %p222, %p223
      %p225 = scmp.ne.s32.totalorder %s217, %s220
      %p226 = scmp.eq.s32.totalorder %s24, 0
      %p227 = por %p225, %p226
      %p228 = scmp.ne.s32.totalorder %s217, %s220
      %p229 = scmp.eq.s32.totalorder %s29, 1
      %p230 = por %p228, %p229
      %p231 = scmp.ne.s32.totalorder %s220, %s221
      %p232 = scmp.eq.s32.totalorder %s29, 0
      %p233 = por %p231, %p232
      %p234 = scmp.ne.s32.totalorder %s220, %s221
      %p235 = scmp.eq.s32.totalorder %s30, 1
      %p236 = por %p234, %p235
      %p238 = scmp.ne.s32.totalorder %s221, %s237
      %p239 = scmp.eq.s32.totalorder %s30, 0
      %p240 = por %p238, %p239
      %p241 = scmp.le.s32.totalorder 1, %s24
      %p242 = scmp.lt.s32.totalorder %s24, 3
      %p243 = pnand %p241, %p242
      %p244 = pneg %p243
      // Predicated region
      $region9: #{tpu_custom_call.1} parent=5 // pred_check
        _
      $region10: #{tpu_custom_call.1} parent=5 // pred_check_branch
        %246 = sbr.rel (%p243) target = $region12
      $region11: #{tpu_custom_call.1} parent=5 // pred_region
        %s247 = ssub.s32 %s24, 1
        // Predicated region
        $region13: #{tpu_custom_call.1} parent=11 // pred_check
          %p248 = pneg %p123
        $region14: #{tpu_custom_call.1} parent=11 // pred_check_branch
          %250 = sbr.rel (%p248) target = $region16
        $region15: #{tpu_custom_call.1} parent=11 // pred_region
          %252 = vsyncadd [#allocation9], 0
          %s253 = sshll.u32 %s3, 4
          %s254 = int_to_ptr.hbm [resolvable:$true] %s253
          %s255 = sshll.u32 [#allocation8], 4
          %s256 = int_to_ptr.vmem [resolvable:$true] %s255
          %261 = dma.hbm_to_vmem [thread:$0]  %s254, 768, %s256, [#allocation9], 64, 64, 4
        $region16: #{tpu_custom_call.1} parent=11 // pred_fallthru
          _
        // Predicated region
        $region17: #{tpu_custom_call.1} parent=11 // pred_check
          %p262 = pneg %p144
        $region18: #{tpu_custom_call.1} parent=11 // pred_check_branch
          %264 = sbr.rel (%p262) target = $region20
        $region19: #{tpu_custom_call.1} parent=11 // pred_region
          _
        $region20: #{tpu_custom_call.1} parent=11 // pred_fallthru
          _
        // Predicated region
        $region21: #{tpu_custom_call.1} parent=11 // pred_check
          %p265 = pneg %p165
        $region22: #{tpu_custom_call.1} parent=11 // pred_check_branch
          %267 = sbr.rel (%p265) target = $region24
        $region23: #{tpu_custom_call.1} parent=11 // pred_region
          _
        $region24: #{tpu_custom_call.1} parent=11 // pred_fallthru
          _
        // Predicated region
        $region25: #{tpu_custom_call.1} parent=11 // pred_check
          %p268 = pneg %p186
        $region26: #{tpu_custom_call.1} parent=11 // pred_check_branch
          %270 = sbr.rel (%p268) target = $region28
        $region27: #{tpu_custom_call.1} parent=11 // pred_region
          _
        $region28: #{tpu_custom_call.1} parent=11 // pred_fallthru
          _
        // Predicated region
        $region29: #{tpu_custom_call.1} parent=11 // pred_check
          %p271 = pneg %p207
        $region30: #{tpu_custom_call.1} parent=11 // pred_check_branch
          %273 = sbr.rel (%p271) target = $region32
        $region31: #{tpu_custom_call.1} parent=11 // pred_region
          _
        $region32: #{tpu_custom_call.1} parent=11 // pred_fallthru
          _
      $region12: #{tpu_custom_call.1} parent=5 // pred_fallthru
        _
      %p274 = scmp.lt.s32.totalorder %s24, 2
      // Predicated region
      $region33: #{tpu_custom_call.1} parent=5 // pred_check
        %p275 = pneg %p274
      $region34: #{tpu_custom_call.1} parent=5 // pred_check_branch
        %277 = sbr.rel (%p275) target = $region36
      $region35: #{tpu_custom_call.1} parent=5 // pred_region
        // Predicated region
        $region37: #{tpu_custom_call.1} parent=35 // pred_check
          %p278 = pneg %p44
        $region38: #{tpu_custom_call.1} parent=35 // pred_check_branch
          %280 = sbr.rel (%p278) target = $region40
        $region39: #{tpu_custom_call.1} parent=35 // pred_region
          %s281 = sand.u32 %s34, 1
          %s282 = scalar_lea.sflag [#allocation3], %s281
          %s283 = sand.u32 %s34, 1
          %s284 = smul.addr %s283, 16
          %s285 = scalar_lea.vmem [#allocation2], %s284
          %287 = vsyncadd %s282, 0
          %s288 = smul.addr %s24, 2
          %s289 = smul.addr %s288, 8
          %s290 = scalar_lea.hbm %s0, %s289
          %s291 = sshll.u32 %s290, 4
          %s292 = int_to_ptr.hbm [resolvable:$true] %s291
          %s293 = sshll.u32 %s285, 4
          %s294 = int_to_ptr.vmem [resolvable:$true] %s293
          %299 = dma.hbm_to_vmem [thread:$0]  %s292, 256, %s294, %s282, 128, 128, 8
        $region40: #{tpu_custom_call.1} parent=35 // pred_fallthru
          _
        // Predicated region
        $region41: #{tpu_custom_call.1} parent=35 // pred_check
          %p300 = pneg %p70
        $region42: #{tpu_custom_call.1} parent=35 // pred_check_branch
          %302 = sbr.rel (%p300) target = $region44
        $region43: #{tpu_custom_call.1} parent=35 // pred_region
          %s303 = sand.u32 %s24, 1
          %s304 = scalar_lea.sflag [#allocation6], %s303
          %s305 = sand.u32 %s60, 1
          %s306 = smul.addr %s305, 16
          %s307 = scalar_lea.vmem [#allocation5], %s306
          %309 = vsyncadd %s304, 0
          %s310 = smul.addr %s24, 2
          %s311 = smul.addr %s310, 8
          %s312 = scalar_lea.hbm %s1, %s311
          %s313 = sshll.u32 %s312, 4
          %s314 = int_to_ptr.hbm [resolvable:$true] %s313
          %s315 = sshll.u32 %s307, 4
          %s316 = int_to_ptr.vmem [resolvable:$true] %s315
          %321 = dma.hbm_to_vmem [thread:$0]  %s314, 256, %s316, %s304, 128, 128, 8
        $region44: #{tpu_custom_call.1} parent=35 // pred_fallthru
          _
        // Predicated region
        $region45: #{tpu_custom_call.1} parent=35 // pred_check
          %p322 = pneg %p96
        $region46: #{tpu_custom_call.1} parent=35 // pred_check_branch
          %324 = sbr.rel (%p322) target = $region48
        $region47: #{tpu_custom_call.1} parent=35 // pred_region
          %s325 = sand.u32 %s24, 1
          %s326 = scalar_lea.sflag [#allocation6], %s325
          %s327 = sand.u32 %s86, 1
          %s328 = smul.addr %s327, 16
          %s329 = scalar_lea.vmem [#allocation7], %s328
          %331 = vsyncadd %s326, 0
          %s332 = smul.addr %s24, 2
          %s333 = smul.addr %s332, 8
          %s334 = scalar_lea.hbm %s2, %s333
          %s335 = sshll.u32 %s334, 4
          %s336 = int_to_ptr.hbm [resolvable:$true] %s335
          %s337 = sshll.u32 %s329, 4
          %s338 = int_to_ptr.vmem [resolvable:$true] %s337
          %343 = dma.hbm_to_vmem [thread:$0]  %s336, 256, %s338, %s326, 128, 128, 8
        $region48: #{tpu_custom_call.1} parent=35 // pred_fallthru
          _
      $region36: #{tpu_custom_call.1} parent=5 // pred_fallthru
        _
      %p344 = scmp.le.s32.totalorder 1, %s24
      %p345 = scmp.lt.s32.totalorder %s24, 3
      %p346 = pnand %p344, %p345
      %p347 = pneg %p346
      // Predicated region
      $region49: #{tpu_custom_call.1} parent=5 // pred_check
        _
      $region50: #{tpu_custom_call.1} parent=5 // pred_check_branch
        %349 = sbr.rel (%p346) target = $region52
      $region51: #{tpu_custom_call.1} parent=5 // pred_region
        %s350 = ssub.s32 %s24, 1
        %s351 = sand.u32 %s37, 1
        %s352 = scalar_lea.sflag [#allocation3], %s351
        %s353 = sand.u32 %s37, 1
        %s354 = smul.addr %s353, 16
        %s355 = scalar_lea.vmem [#allocation2], %s354
        // Predicated region
        $region53: #{tpu_custom_call.1} parent=51 // pred_check
          %p356 = pneg %p50
        $region54: #{tpu_custom_call.1} parent=51 // pred_check_branch
          %358 = sbr.rel (%p356) target = $region56
        $region55: #{tpu_custom_call.1} parent=51 // pred_region
          %360 = dma.done %s352, 256
        $region56: #{tpu_custom_call.1} parent=51 // pred_fallthru
          _
        %s361 = sand.u32 %s29, 1
        %s362 = scalar_lea.sflag [#allocation6], %s361
        %s363 = sand.u32 %s63, 1
        %s364 = smul.addr %s363, 16
        %s365 = scalar_lea.vmem [#allocation5], %s364
        // Predicated region
        $region57: #{tpu_custom_call.1} parent=51 // pred_check
          %p366 = pneg %p76
        $region58: #{tpu_custom_call.1} parent=51 // pred_check_branch
          %368 = sbr.rel (%p366) target = $region60
        $region59: #{tpu_custom_call.1} parent=51 // pred_region
          %370 = dma.done %s362, 256
        $region60: #{tpu_custom_call.1} parent=51 // pred_fallthru
          _
        %s371 = sand.u32 %s29, 1
        %s372 = scalar_lea.sflag [#allocation6], %s371
        %s373 = sand.u32 %s89, 1
        %s374 = smul.addr %s373, 16
        %s375 = scalar_lea.vmem [#allocation7], %s374
        // Predicated region
        $region61: #{tpu_custom_call.1} parent=51 // pred_check
          %p376 = pneg %p102
        $region62: #{tpu_custom_call.1} parent=51 // pred_check_branch
          %378 = sbr.rel (%p376) target = $region64
        $region63: #{tpu_custom_call.1} parent=51 // pred_region
          %380 = dma.done %s372, 256
        $region64: #{tpu_custom_call.1} parent=51 // pred_fallthru
          _
        // Predicated region
        $region65: #{tpu_custom_call.1} parent=51 // pred_check
          %p381 = pneg %p123
        $region66: #{tpu_custom_call.1} parent=51 // pred_check_branch
          %383 = sbr.rel (%p381) target = $region68
        $region67: #{tpu_custom_call.1} parent=51 // pred_region
          %385 = dma.done [#allocation9], 768
        $region68: #{tpu_custom_call.1} parent=51 // pred_fallthru
          _
        %s386 = sand.u32 %s37, 1
        %s387 = scalar_lea.sflag [#allocation3], %s386
        %s388 = sand.u32 %s37, 1
        %s389 = smul.addr %s388, 16
        %s390 = scalar_lea.vmem [#allocation2], %s389
        %p391 = pneg %p50
        %p392 = pneg %p47
        %s393 = sand.u32 %s29, 1
        %s394 = scalar_lea.sflag [#allocation6], %s393
        %s395 = sand.u32 %s63, 1
        %s396 = smul.addr %s395, 16
        %s397 = scalar_lea.vmem [#allocation5], %s396
        %p398 = pneg %p76
        %p399 = pneg %p73
        %s400 = sand.u32 %s29, 1
        %s401 = scalar_lea.sflag [#allocation6], %s400
        %s402 = sand.u32 %s89, 1
        %s403 = smul.addr %s402, 16
        %s404 = scalar_lea.vmem [#allocation7], %s403
        %p405 = pneg %p102
        %p406 = pneg %p99
        %p407 = pneg %p123
        %p408 = pneg %p120
        %p409 = pneg %p144
        %p410 = pneg %p141
        %p411 = pneg %p165
        %p412 = pneg %p162
        %p413 = pneg %p186
        %p414 = pneg %p183
        %p415 = pneg %p207
        %p416 = pneg %p204
        %p417 = pneg %p233
        %p418 = pneg %p230
        %s419 = sand.u32 %s220, 1
        %s420 = scalar_lea.sflag [#allocation4], %s419
        %s421 = sand.u32 %s220, 1
        %s422 = smul.addr %s421, 8
        %s423 = scalar_lea.vmem [#allocation10], %s422
        %v425 = vld [vmem:[%s355] sm:$0xff]
        %v426 = vld [vmem:[%s355 + $0x8] sm:$0xff]
        %v427 = vpack.c.bf16 %v426, %v425
        %v428 = vld [vmem:[%s365] sm:$0xff]
        %v429 = vld [vmem:[%s365 + $0x8] sm:$0xff]
        %v430 = vpack.c.bf16 %v429, %v428
        %v431 = vld [vmem:[%s375] sm:$0xff]
        %v432 = vld [vmem:[%s375 + $0x8] sm:$0xff]
        %v433 = vpack.c.bf16 %v432, %v431
        %v434 = vld [vmem:[#allocation8] sm:$0xf]
        %v435 = vld [vmem:[#allocation8 + $0x4] sm:$0xf]
        %v436 = vld [vmem:[#allocation8 + $0x8] sm:$0xf]
        %v437 = vld [vmem:[#allocation8 + $0xc] sm:$0xf]
        %v438 = vld [vmem:[%s5] sm:$0x1]
        %v439 = vperm.slane %v438, 0
        %v444 = vunpack.c.l.b16 %v434
        %v445 = vunpack.c.l.b16 %v435
        %v446 = vunpack.c.l.b16 %v436
        %v447 = vunpack.c.l.b16 %v437
        %v448 = vpack.c.b16 %v445, %v444
        %v449 = vpack.c.b16 %v447, %v446
        %vm452 = vcmask 261120
        %v454 = vsel %vm452, %v427, 0
        %456 = vmatpush.bf16.msra.mxu0 0
        %457 = vmatpush.bf16.msra.mxu0 0
        %458 = vmatpush.bf16.msra.mxu0 0
        %459 = vmatpush.bf16.msra.mxu0 0
        %460 = vmatpush.bf16.msra.mxu0 0
        %461 = vmatpush.bf16.msra.mxu0 0
        %462 = vmatpush.bf16.msra.mxu0 %v449
        %463 = vmatpush.bf16.msra.mxu0 %v448
        %464 = vmatmul.bf16.gmra.mxu0 %v454
        %v465 = vpop.f32.mrf.mxu0
        %v466 = vadd.f32 %v439, %v465
        %v467 = vpop.f32.mrf.mxu0
        %v468 = vadd.f32 %v439, %v467
        %469 = vdwg.mxu0
        %s470 = scalar_lea.vmem [#allocation8], 16
        %v471 = vld [vmem:[%s470] sm:$0xf]
        %v472 = vld [vmem:[%s470 + $0x4] sm:$0xf]
        %v473 = vld [vmem:[%s470 + $0x8] sm:$0xf]
        %v474 = vld [vmem:[%s470 + $0xc] sm:$0xf]
        %v475 = vld [vmem:[%s5 + $0x1] sm:$0x1]
        %v476 = vperm.slane %v475, 0
        %v481 = vunpack.c.l.b16 %v471
        %v482 = vunpack.c.l.b16 %v472
        %v483 = vunpack.c.l.b16 %v473
        %v484 = vunpack.c.l.b16 %v474
        %v485 = vpack.c.b16 %v482, %v481
        %v486 = vpack.c.b16 %v484, %v483
        %v490 = vsel %vm452, %v430, 0
        %492 = vmatpush.bf16.msra.mxu0 0
        %493 = vmatpush.bf16.msra.mxu0 0
        %494 = vmatpush.bf16.msra.mxu0 0
        %495 = vmatpush.bf16.msra.mxu0 0
        %496 = vmatpush.bf16.msra.mxu0 0
        %497 = vmatpush.bf16.msra.mxu0 0
        %498 = vmatpush.bf16.msra.mxu0 %v486
        %499 = vmatpush.bf16.msra.mxu0 %v485
        %500 = vmatmul.bf16.gmra.mxu0 %v490
        %v501 = vpop.f32.mrf.mxu0
        %v502 = vadd.f32 %v476, %v501
        %v503 = vpop.f32.mrf.mxu0
        %v504 = vadd.f32 %v476, %v503
        %505 = vdwg.mxu0
        %s506 = scalar_lea.vmem [#allocation8], 32
        %v507 = vld [vmem:[%s506] sm:$0xf]
        %v508 = vld [vmem:[%s506 + $0x4] sm:$0xf]
        %v509 = vld [vmem:[%s506 + $0x8] sm:$0xf]
        %v510 = vld [vmem:[%s506 + $0xc] sm:$0xf]
        %v511 = vld [vmem:[%s5 + $0x2] sm:$0x1]
        %v512 = vperm.slane %v511, 0
        %v517 = vunpack.c.l.b16 %v507
        %v518 = vunpack.c.l.b16 %v508
        %v519 = vunpack.c.l.b16 %v509
        %v520 = vunpack.c.l.b16 %v510
        %v521 = vpack.c.b16 %v518, %v517
        %v522 = vpack.c.b16 %v520, %v519
        %v526 = vsel %vm452, %v433, 0
        %528 = vmatpush.bf16.msra.mxu0 0
        %529 = vmatpush.bf16.msra.mxu0 0
        %530 = vmatpush.bf16.msra.mxu0 0
        %531 = vmatpush.bf16.msra.mxu0 0
        %532 = vmatpush.bf16.msra.mxu0 0
        %533 = vmatpush.bf16.msra.mxu0 0
        %534 = vmatpush.bf16.msra.mxu0 %v522
        %535 = vmatpush.bf16.msra.mxu0 %v521
        %536 = vmatmul.bf16.gmra.mxu0 %v526
        %v537 = vpop.f32.mrf.mxu0
        %v538 = vadd.f32 %v512, %v537
        %v539 = vpop.f32.mrf.mxu0
        %v540 = vadd.f32 %v512, %v539
        %541 = vdwg.mxu0
        %v542 = vld [vmem:[%s5 + $0x3] sm:$0x1]
        %v543 = vpack.c.bf16 %v466, %v466
        %v544 = vpack.c.bf16 %v468, %v468
        %v545 = vpack.c.bf16 %v504, %v502
        %v546 = vpack.c.bf16 %v540, %v538
        %v547 = vld [vmem:[%s6] sm:$0xf]
        %v548 = vld [vmem:[%s6 + $0x4] sm:$0xf]
        %v549 = vld [vmem:[%s7] sm:$0xf]
        %v550 = vld [vmem:[%s7 + $0x4] sm:$0xf]
        %551 = vxpose.xlu0.c.b16.start [1/8] %v545, 128
        %552 = vxpose.xlu0.c.b16.cont [2/8] 0, 128
        %553 = vxpose.xlu0.c.b16.cont [3/8] 0, 128
        %554 = vxpose.xlu0.c.b16.cont [4/8] 0, 128
        %555 = vxpose.xlu0.c.b16.cont [5/8] 0, 128
        %556 = vxpose.xlu0.c.b16.cont [6/8] 0, 128
        %557 = vxpose.xlu0.c.b16.cont [7/8] 0, 128
        %558 = vxpose.xlu0.c.b16.end [8/8] 0, 128
        %v559 = vpop.trf.xlu0
        %v560 = vpop.trf.xlu0
        %v561 = vpop.trf.xlu0
        %v562 = vpop.trf.xlu0
        %v563 = vpop.trf.xlu0
        %v564 = vpop.trf.xlu0
        %v565 = vpop.trf.xlu0
        %v566 = vpop.trf.xlu0
        %v569 = vunpack.c.l.b16 %v547
        %v570 = vunpack.c.l.b16 %v548
        %v571 = vpack.c.b16 %v570, %v569
        %vm573 = vcmask 130048
        %v575 = vsel %vm573, %v559, 0
        %v578 = vsel %vm573, %v560, 0
        %580 = vmatpush.bf16.msra.mxu0 0
        %581 = vmatpush.bf16.msra.mxu0 0
        %582 = vmatpush.bf16.msra.mxu0 0
        %583 = vmatpush.bf16.msra.mxu0 0
        %584 = vmatpush.bf16.msra.mxu0 0
        %585 = vmatpush.bf16.msra.mxu0 0
        %586 = vmatpush.bf16.msra.mxu0 0
        %587 = vmatpush.bf16.msra.mxu0 %v571
        %588 = vmatmul.bf16.gmra.mxu0 %v575
        %v589 = vpop.f32.mrf.mxu0
        %v590 = vadd.f32 0.0, %v589
        %v591 = vpop.f32.mrf.mxu0
        %v592 = vadd.f32 0.0, %v591
        %593 = vmatmul.bf16.gmra.mxu0 %v578
        %v594 = vpop.f32.mrf.mxu0
        %v595 = vadd.f32 0.0, %v594
        %v596 = vpop.f32.mrf.mxu0
        %v597 = vadd.f32 0.0, %v596
        %598 = vdwg.mxu0
        %v599 = vpack.c.bf16 %v590, %v590
        %v600 = vpack.c.bf16 %v592, %v592
        %v601 = vpack.c.bf16 %v595, %v595
        %v602 = vpack.c.bf16 %v597, %v597
        %v605 = vunpack.c.l.b16 %v549
        %v606 = vunpack.c.l.b16 %v550
        %v607 = vpack.c.b16 %v606, %v605
        %609 = vxpose.xlu0.c.b16.start [1/8] %v607, 128
        %610 = vxpose.xlu0.c.b16.cont [2/8] 0, 128
        %611 = vxpose.xlu0.c.b16.cont [3/8] 0, 128
        %612 = vxpose.xlu0.c.b16.cont [4/8] 0, 128
        %613 = vxpose.xlu0.c.b16.cont [5/8] 0, 128
        %614 = vxpose.xlu0.c.b16.cont [6/8] 0, 128
        %615 = vxpose.xlu0.c.b16.cont [7/8] 0, 128
        %616 = vxpose.xlu0.c.b16.end [8/8] 0, 128
        %v617 = vpop.trf.xlu0
        %v618 = vpop.trf.xlu0
        %v619 = vpop.trf.xlu0
        %v620 = vpop.trf.xlu0
        %v621 = vpop.trf.xlu0
        %v622 = vpop.trf.xlu0
        %v623 = vpop.trf.xlu0
        %v624 = vpop.trf.xlu0
        %v626 = vsel %vm573, %v617, 0
        %628 = vmatpush.bf16.msra.mxu0 0
        %629 = vmatpush.bf16.msra.mxu0 0
        %630 = vmatpush.bf16.msra.mxu0 0
        %631 = vmatpush.bf16.msra.mxu0 0
        %632 = vmatpush.bf16.msra.mxu0 0
        %633 = vmatpush.bf16.msra.mxu0 0
        %634 = vmatpush.bf16.msra.mxu0 0
        %635 = vmatpush.bf16.msra.mxu0 %v546
        %636 = vmatmul.bf16.gmra.mxu0 %v626
        %v637 = vpop.f32.mrf.mxu0
        %v638 = vadd.f32 0.0, %v637
        %v639 = vpop.f32.mrf.mxu0
        %640 = vdwg.mxu0
        %v641 = vpack.c.bf16 %v638, %v638
        %v644 = vunpack.c.l.b16 %v543
        %v645 = vunpack.c.l.b16 %v544
        %v646 = vpack.c.b16 %v645, %v644
        %vm647 = vcmask 64512
        %v649 = vsel %vm647, %v646, 0
        %vm651 = vcmask 1043456
        %v653 = vsel %vm651, %v599, 0
        %655 = vmatpush.bf16.msra.mxu0 0
        %656 = vmatpush.bf16.msra.mxu0 0
        %657 = vmatpush.bf16.msra.mxu0 0
        %658 = vmatpush.bf16.msra.mxu0 0
        %659 = vmatpush.bf16.msra.mxu0 0
        %660 = vmatpush.bf16.msra.mxu0 0
        %661 = vmatpush.bf16.msra.mxu0 0
        %662 = vmatpush.bf16.msra.mxu0 %v653
        %663 = vmatmul.bf16.gmra.mxu0 %v649
        %v664 = vpop.f32.mrf.mxu0
        %v665 = vadd.f32 0.0, %v664
        %v666 = vpop.f32.mrf.mxu0
        %v667 = vadd.f32 0.0, %v666
        %668 = vdwg.mxu0
        %v669 = vsel %vm647, %v665, -inf
        %670 = vmax.xlane.f32.xlu0 %v669
        %v671 = vpop.xlane.xlu0 %670
        %v672 = vsel %vm647, %v667, -inf
        %673 = vmax.xlane.f32.xlu0 %v672
        %v674 = vpop.xlane.xlu0 %673
        %v675 = vsub.f32 %v665, %v671
        %v676 = vsub.f32 %v667, %v674
        %v677 = vmul.f32 %v675, 1.442695
        %v678 = vpow.pop %v677
        %v679 = vmul.f32 %v676, 1.442695
        %v680 = vpow.pop %v679
        %v681 = vsel %vm647, %v678, 0.0
        %682 = vadd.xlane.f32.xlu0 %v681
        %v683 = vpop.xlane.xlu0 %682
        %v684 = vsel %vm647, %v680, 0.0
        %685 = vadd.xlane.f32.xlu0 %v684
        %v686 = vpop.xlane.xlu0 %685
        %v687 = vrcp.pop %v683
        %v688 = vrcp.pop %v686
        %v689 = vmul.f32 %v678, %v687
        %v690 = vmul.f32 %v680, %v688
        %v691 = vpack.c.bf16 %v690, %v689
        %v693 = vsel %vm647, %v691, 0
        %v696 = vsel %vm651, %v641, 0
        %698 = vmatpush.bf16.msra.mxu0 0
        %699 = vmatpush.bf16.msra.mxu0 0
        %700 = vmatpush.bf16.msra.mxu0 0
        %701 = vmatpush.bf16.msra.mxu0 0
        %702 = vmatpush.bf16.msra.mxu0 0
        %703 = vmatpush.bf16.msra.mxu0 0
        %704 = vmatpush.bf16.msra.mxu0 0
        %705 = vmatpush.bf16.msra.mxu0 %v696
        %706 = vmatmul.bf16.gmra.mxu0 %v693
        %v707 = vpop.f32.mrf.mxu0
        %v708 = vadd.f32 0.0, %v707
        %v709 = vpop.f32.mrf.mxu0
        %v710 = vadd.f32 0.0, %v709
        %711 = vdwg.mxu0
        %v712 = vpack.c.bf16 %v710, %v708
        %v713 = vld [vmem:[%s4] sm:$0xf]
        %714 = vrot.lane.b32.xlu0 %v646, 120
        %v715 = vpop.permute.xlu0 %714
        %v717 = vsel %vm647, %v715, 0
        %v720 = vsel %vm651, %v600, 0
        %722 = vmatpush.bf16.msra.mxu0 0
        %723 = vmatpush.bf16.msra.mxu0 0
        %724 = vmatpush.bf16.msra.mxu0 0
        %725 = vmatpush.bf16.msra.mxu0 0
        %726 = vmatpush.bf16.msra.mxu0 0
        %727 = vmatpush.bf16.msra.mxu0 0
        %728 = vmatpush.bf16.msra.mxu0 0
        %729 = vmatpush.bf16.msra.mxu0 %v720
        %730 = vmatmul.bf16.gmra.mxu0 %v717
        %v731 = vpop.f32.mrf.mxu0
        %v732 = vadd.f32 0.0, %v731
        %v733 = vpop.f32.mrf.mxu0
        %v734 = vadd.f32 0.0, %v733
        %735 = vdwg.mxu0
        %v736 = vsel %vm647, %v732, -inf
        %737 = vmax.xlane.f32.xlu0 %v736
        %v738 = vpop.xlane.xlu0 %737
        %v739 = vsel %vm647, %v734, -inf
        %740 = vmax.xlane.f32.xlu0 %v739
        %v741 = vpop.xlane.xlu0 %740
        %v742 = vsub.f32 %v732, %v738
        %v743 = vsub.f32 %v734, %v741
        %v744 = vmul.f32 %v742, 1.442695
        %v745 = vpow.pop %v744
        %v746 = vmul.f32 %v743, 1.442695
        %v747 = vpow.pop %v746
        %v748 = vsel %vm647, %v745, 0.0
        %749 = vadd.xlane.f32.xlu0 %v748
        %v750 = vpop.xlane.xlu0 %749
        %v751 = vsel %vm647, %v747, 0.0
        %752 = vadd.xlane.f32.xlu0 %v751
        %v753 = vpop.xlane.xlu0 %752
        %v754 = vrcp.pop %v750
        %v755 = vrcp.pop %v753
        %v756 = vmul.f32 %v745, %v754
        %v757 = vmul.f32 %v747, %v755
        %v758 = vpack.c.bf16 %v757, %v756
        %v760 = vunpack.c.l.b16 %v641
        %v761 = vpack.c.b16 %v760, %v760
        %762 = vrot.lane.b32.xlu0 %v761, 120
        %v763 = vpop.permute.xlu0 %762
        %v765 = vsel %vm647, %v758, 0
        %v768 = vsel %vm651, %v763, 0
        %770 = vmatpush.bf16.msra.mxu0 0
        %771 = vmatpush.bf16.msra.mxu0 0
        %772 = vmatpush.bf16.msra.mxu0 0
        %773 = vmatpush.bf16.msra.mxu0 0
        %774 = vmatpush.bf16.msra.mxu0 0
        %775 = vmatpush.bf16.msra.mxu0 0
        %776 = vmatpush.bf16.msra.mxu0 0
        %777 = vmatpush.bf16.msra.mxu0 %v768
        %778 = vmatmul.bf16.gmra.mxu0 %v765
        %v779 = vpop.f32.mrf.mxu0
        %v780 = vadd.f32 0.0, %v779
        %v781 = vpop.f32.mrf.mxu0
        %v782 = vadd.f32 0.0, %v781
        %783 = vdwg.mxu0
        %v784 = vpack.c.bf16 %v782, %v780
        %s785 = scalar_lea.vmem %s4, 4
        %v786 = vld [vmem:[%s785] sm:$0xf]
        %v788 = vsel %vm647, %v784, 0
        %v791 = vsel %vm651, %v786, 0
        %793 = vmatpush.bf16.msra.mxu0 0
        %794 = vmatpush.bf16.msra.mxu0 0
        %795 = vmatpush.bf16.msra.mxu0 0
        %796 = vmatpush.bf16.msra.mxu0 0
        %797 = vmatpush.bf16.msra.mxu0 0
        %798 = vmatpush.bf16.msra.mxu0 0
        %799 = vmatpush.bf16.msra.mxu0 0
        %800 = vmatpush.bf16.msra.mxu0 %v791
        %801 = vmatmul.bf16.gmra.mxu0 %v788
        %v802 = vpop.f32.mrf.mxu0
        %v803 = vadd.f32 0.0, %v802
        %v804 = vpop.f32.mrf.mxu0
        %v805 = vadd.f32 0.0, %v804
        %806 = vdwg.mxu0
        %v808 = vsel %vm647, %v712, 0
        %v811 = vsel %vm651, %v713, 0
        %813 = vmatpush.bf16.msra.mxu0 0
        %814 = vmatpush.bf16.msra.mxu0 0
        %815 = vmatpush.bf16.msra.mxu0 0
        %816 = vmatpush.bf16.msra.mxu0 0
        %817 = vmatpush.bf16.msra.mxu0 0
        %818 = vmatpush.bf16.msra.mxu0 0
        %819 = vmatpush.bf16.msra.mxu0 0
        %820 = vmatpush.bf16.msra.mxu0 %v811
        %821 = vmatmul.bf16.gmra.mxu0 %v808
        %v822 = vpop.f32.mrf.mxu0
        %v823 = vadd.f32 %v803, %v822
        %v824 = vpop.f32.mrf.mxu0
        %v825 = vadd.f32 %v805, %v824
        %826 = vdwg.mxu0
        %827 = vrot.lane.b32.xlu0 %v646, 112
        %v828 = vpop.permute.xlu0 %827
        %v830 = vsel %vm647, %v828, 0
        %v833 = vsel %vm651, %v601, 0
        %835 = vmatpush.bf16.msra.mxu0 0
        %836 = vmatpush.bf16.msra.mxu0 0
        %837 = vmatpush.bf16.msra.mxu0 0
        %838 = vmatpush.bf16.msra.mxu0 0
        %839 = vmatpush.bf16.msra.mxu0 0
        %840 = vmatpush.bf16.msra.mxu0 0
        %841 = vmatpush.bf16.msra.mxu0 0
        %842 = vmatpush.bf16.msra.mxu0 %v833
        %843 = vmatmul.bf16.gmra.mxu0 %v830
        %v844 = vpop.f32.mrf.mxu0
        %v845 = vadd.f32 0.0, %v844
        %v846 = vpop.f32.mrf.mxu0
        %v847 = vadd.f32 0.0, %v846
        %848 = vdwg.mxu0
        %v849 = vsel %vm647, %v845, -inf
        %850 = vmax.xlane.f32.xlu0 %v849
        %v851 = vpop.xlane.xlu0 %850
        %v852 = vsel %vm647, %v847, -inf
        %853 = vmax.xlane.f32.xlu0 %v852
        %v854 = vpop.xlane.xlu0 %853
        %v855 = vsub.f32 %v845, %v851
        %v856 = vsub.f32 %v847, %v854
        %v857 = vmul.f32 %v855, 1.442695
        %v858 = vpow.pop %v857
        %v859 = vmul.f32 %v856, 1.442695
        %v860 = vpow.pop %v859
        %v861 = vsel %vm647, %v858, 0.0
        %862 = vadd.xlane.f32.xlu0 %v861
        %v863 = vpop.xlane.xlu0 %862
        %v864 = vsel %vm647, %v860, 0.0
        %865 = vadd.xlane.f32.xlu0 %v864
        %v866 = vpop.xlane.xlu0 %865
        %v867 = vrcp.pop %v863
        %v868 = vrcp.pop %v866
        %v869 = vmul.f32 %v858, %v867
        %v870 = vmul.f32 %v860, %v868
        %v871 = vpack.c.bf16 %v870, %v869
        %872 = vrot.lane.b32.xlu0 %v761, 112
        %v873 = vpop.permute.xlu0 %872
        %v875 = vsel %vm647, %v871, 0
        %v878 = vsel %vm651, %v873, 0
        %880 = vmatpush.bf16.msra.mxu0 0
        %881 = vmatpush.bf16.msra.mxu0 0
        %882 = vmatpush.bf16.msra.mxu0 0
        %883 = vmatpush.bf16.msra.mxu0 0
        %884 = vmatpush.bf16.msra.mxu0 0
        %885 = vmatpush.bf16.msra.mxu0 0
        %886 = vmatpush.bf16.msra.mxu0 0
        %887 = vmatpush.bf16.msra.mxu0 %v878
        %888 = vmatmul.bf16.gmra.mxu0 %v875
        %v889 = vpop.f32.mrf.mxu0
        %v890 = vadd.f32 0.0, %v889
        %v891 = vpop.f32.mrf.mxu0
        %v892 = vadd.f32 0.0, %v891
        %893 = vdwg.mxu0
        %v894 = vpack.c.bf16 %v892, %v890
        %s895 = scalar_lea.vmem %s4, 8
        %v896 = vld [vmem:[%s895] sm:$0xf]
        %v898 = vsel %vm647, %v894, 0
        %v901 = vsel %vm651, %v896, 0
        %903 = vmatpush.bf16.msra.mxu0 0
        %904 = vmatpush.bf16.msra.mxu0 0
        %905 = vmatpush.bf16.msra.mxu0 0
        %906 = vmatpush.bf16.msra.mxu0 0
        %907 = vmatpush.bf16.msra.mxu0 0
        %908 = vmatpush.bf16.msra.mxu0 0
        %909 = vmatpush.bf16.msra.mxu0 0
        %910 = vmatpush.bf16.msra.mxu0 %v901
        %911 = vmatmul.bf16.gmra.mxu0 %v898
        %v912 = vpop.f32.mrf.mxu0
        %v913 = vadd.f32 0.0, %v912
        %v914 = vpop.f32.mrf.mxu0
        %v915 = vadd.f32 0.0, %v914
        %916 = vdwg.mxu0
        %v917 = vadd.f32 %v823, %v913
        %v918 = vadd.f32 %v825, %v915
        %919 = vrot.lane.b32.xlu0 %v646, 104
        %v920 = vpop.permute.xlu0 %919
        %v922 = vsel %vm647, %v920, 0
        %v925 = vsel %vm651, %v602, 0
        %927 = vmatpush.bf16.msra.mxu0 0
        %928 = vmatpush.bf16.msra.mxu0 0
        %929 = vmatpush.bf16.msra.mxu0 0
        %930 = vmatpush.bf16.msra.mxu0 0
        %931 = vmatpush.bf16.msra.mxu0 0
        %932 = vmatpush.bf16.msra.mxu0 0
        %933 = vmatpush.bf16.msra.mxu0 0
        %934 = vmatpush.bf16.msra.mxu0 %v925
        %935 = vmatmul.bf16.gmra.mxu0 %v922
        %v936 = vpop.f32.mrf.mxu0
        %v937 = vadd.f32 0.0, %v936
        %v938 = vpop.f32.mrf.mxu0
        %v939 = vadd.f32 0.0, %v938
        %940 = vdwg.mxu0
        %v941 = vsel %vm647, %v937, -inf
        %942 = vmax.xlane.f32.xlu0 %v941
        %v943 = vpop.xlane.xlu0 %942
        %v944 = vsel %vm647, %v939, -inf
        %945 = vmax.xlane.f32.xlu0 %v944
        %v946 = vpop.xlane.xlu0 %945
        %v947 = vsub.f32 %v937, %v943
        %v948 = vsub.f32 %v939, %v946
        %v949 = vmul.f32 %v947, 1.442695
        %v950 = vpow.pop %v949
        %v951 = vmul.f32 %v948, 1.442695
        %v952 = vpow.pop %v951
        %v953 = vsel %vm647, %v950, 0.0
        %954 = vadd.xlane.f32.xlu0 %v953
        %v955 = vpop.xlane.xlu0 %954
        %v956 = vsel %vm647, %v952, 0.0
        %957 = vadd.xlane.f32.xlu0 %v956
        %v958 = vpop.xlane.xlu0 %957
        %v959 = vrcp.pop %v955
        %v960 = vrcp.pop %v958
        %v961 = vmul.f32 %v950, %v959
        %v962 = vmul.f32 %v952, %v960
        %v963 = vpack.c.bf16 %v962, %v961
        %964 = vrot.lane.b32.xlu0 %v761, 104
        %v965 = vpop.permute.xlu0 %964
        %v967 = vsel %vm647, %v963, 0
        %v970 = vsel %vm651, %v965, 0
        %972 = vmatpush.bf16.msra.mxu0 0
        %973 = vmatpush.bf16.msra.mxu0 0
        %974 = vmatpush.bf16.msra.mxu0 0
        %975 = vmatpush.bf16.msra.mxu0 0
        %976 = vmatpush.bf16.msra.mxu0 0
        %977 = vmatpush.bf16.msra.mxu0 0
        %978 = vmatpush.bf16.msra.mxu0 0
        %979 = vmatpush.bf16.msra.mxu0 %v970
        %980 = vmatmul.bf16.gmra.mxu0 %v967
        %v981 = vpop.f32.mrf.mxu0
        %v982 = vadd.f32 0.0, %v981
        %v983 = vpop.f32.mrf.mxu0
        %v984 = vadd.f32 0.0, %v983
        %985 = vdwg.mxu0
        %v986 = vpack.c.bf16 %v984, %v982
        %s987 = scalar_lea.vmem %s4, 12
        %v988 = vld [vmem:[%s987] sm:$0xf]
        %v990 = vsel %vm647, %v986, 0
        %v993 = vsel %vm651, %v988, 0
        %995 = vmatpush.bf16.msra.mxu0 0
        %996 = vmatpush.bf16.msra.mxu0 0
        %997 = vmatpush.bf16.msra.mxu0 0
        %998 = vmatpush.bf16.msra.mxu0 0
        %999 = vmatpush.bf16.msra.mxu0 0
        %1000 = vmatpush.bf16.msra.mxu0 0
        %1001 = vmatpush.bf16.msra.mxu0 0
        %1002 = vmatpush.bf16.msra.mxu0 %v993
        %1003 = vmatmul.bf16.gmra.mxu0 %v990
        %v1004 = vpop.f32.mrf.mxu0
        %v1005 = vadd.f32 0.0, %v1004
        %v1006 = vpop.f32.mrf.mxu0
        %v1007 = vadd.f32 0.0, %v1006
        %1008 = vdwg.mxu0
        %v1009 = vadd.f32 %v917, %v1005
        %v1010 = vadd.f32 %v918, %v1007
        %v1011 = vperm.slane %v542, 0
        %v1012 = vadd.f32 %v1009, %v1011
        %v1013 = vadd.f32 %v1010, %v1011
        %v1014 = vpack.c.bf16 %v1012, %v1012
        %v1015 = vpack.c.bf16 %v1013, %v1013
        %vm1016 = vcmask 257024
        %1017 = vst.msk [vmem:[%s423] sm:$0xf] %vm1016, %v1014
        %1018 = vst.msk [vmem:[%s423 + $0x4] sm:$0xf] %vm1016, %v1015
        %s1019 = sand.u32 %s220, 1
        %s1020 = scalar_lea.sflag [#allocation4], %s1019
        %s1021 = sand.u32 %s220, 1
        %s1022 = smul.addr %s1021, 8
        %s1023 = scalar_lea.vmem [#allocation10], %s1022
        // Predicated region
        $region69: #{tpu_custom_call.1} parent=51 // pred_check
          %p1024 = pneg %p230
        $region70: #{tpu_custom_call.1} parent=51 // pred_check_branch
          %1026 = sbr.rel (%p1024) target = $region72
        $region71: #{tpu_custom_call.1} parent=51 // pred_region
          %1028 = vsyncadd %s1020, 0
          %s1029 = smul.addr %s29, 2
          %s1030 = smul.addr %s1029, 4
          %s1031 = scalar_lea.hbm %s8, %s1030
          %s1032 = sshll.u32 %s1023, 4
          %s1033 = int_to_ptr.vmem [resolvable:$true] %s1032
          %s1034 = sshll.u32 %s1031, 4
          %s1035 = int_to_ptr.hbm [resolvable:$true] %s1034
          %1040 = dma.vmem_to_hbm [thread:$0]  %s1033, 128, %s1035, %s1020, 64, 64, 4
        $region72: #{tpu_custom_call.1} parent=51 // pred_fallthru
          _
      $region52: #{tpu_custom_call.1} parent=5 // pred_fallthru
        _
      %p1041 = scmp.le.s32.totalorder 2, %s24
      // Predicated region
      $region73: #{tpu_custom_call.1} parent=5 // pred_check
        %p1042 = pneg %p1041
      $region74: #{tpu_custom_call.1} parent=5 // pred_check_branch
        %1044 = sbr.rel (%p1042) target = $region76
      $region75: #{tpu_custom_call.1} parent=5 // pred_region
        %s1045 = ssub.s32 %s24, 2
        // Predicated region
        $region77: #{tpu_custom_call.1} parent=75 // pred_check
          %p1046 = pneg %p236
        $region78: #{tpu_custom_call.1} parent=75 // pred_check_branch
          %1048 = sbr.rel (%p1046) target = $region80
        $region79: #{tpu_custom_call.1} parent=75 // pred_region
          %s1049 = sand.u32 %s221, 1
          %s1050 = scalar_lea.sflag [#allocation4], %s1049
          %s1051 = sand.u32 %s221, 1
          %s1052 = smul.addr %s1051, 8
          %s1053 = scalar_lea.vmem [#allocation10], %s1052
          %1055 = dma.done %s1050, 128
        $region80: #{tpu_custom_call.1} parent=75 // pred_fallthru
          _
      $region76: #{tpu_custom_call.1} parent=5 // pred_fallthru
        _
    $region6: #{tpu_custom_call.1} parent=1 // loop_footer
      %s28 = sadd.s32 1, %s24
    $region7: #{tpu_custom_call.1} parent=1 // loop_footer_branch
      %23 = sbr.rel target = $region3
    $region8: #{tpu_custom_call.1} parent=1 // loop_exit
      _
    %1056 = vsyncpa [#allocation3], 1
    %s1057 = scalar_lea.sflag [#allocation3], 1
    %1058 = vsyncpa %s1057, 1
    %1059 = vsyncpa [#allocation6], 1
    %s1060 = scalar_lea.sflag [#allocation6], 1
    %1061 = vsyncpa %s1060, 1
    %1062 = vsyncpa [#allocation9], 1
    %1063 = vsyncpa [#allocation4], 1
    %s1064 = scalar_lea.sflag [#allocation4], 1
    %1065 = vsyncpa %s1064, 1

</llo_original>
